<compile_context>
chip_gen: v7x
topology: tpu7x:2x2x1
jax: 0.10.0
libtpu: 0.0.40
codegen_flags: <defaults>
</compile_context>

<pallas_src>
import functools
import math

import jax
import jax.numpy as jnp
from jax import lax
from jax.experimental import pallas as pl
from jax.experimental.pallas import tpu as pltpu


# -----------------------------------------------------------------------------
# Kernel: one grid step == (one batch element, one query-row tile).
# -----------------------------------------------------------------------------
def _bert_self_attn_kernel(
    hs_ref, mask_ref,
    wq_ref, bq_ref, wk_ref, bk_ref, wv_ref, bv_ref,
    out_ref,
    k_vmem, v_vmem,
    *, num_heads, head_dim, scale, block_q, block_k,
):
    # hs_ref  : (S, H) fp32 — full sequence for this batch element; its block
    #           index is constant in i, so it stays resident across q tiles.
    # mask_ref: (1, S) fp32 — additive extended mask for this batch element.
    # k_vmem / v_vmem : (S, H) bf16 scratch — projected K / V, written once per
    #           batch element (at query-tile 0) and reused by every q tile.
    i = pl.program_id(1)
    seq_len = hs_ref.shape[0]
    num_k_tiles = seq_len // block_k

    # ---- K / V projection: once per batch element (hoisted out of i loop) ---
    @pl.when(i == 0)
    def _project_kv():
        hs16 = hs_ref[...].astype(jnp.bfloat16)
        k = jnp.dot(hs16, wk_ref[...], preferred_element_type=jnp.float32) + bk_ref[...]
        v = jnp.dot(hs16, wv_ref[...], preferred_element_type=jnp.float32) + bv_ref[...]
        k_vmem[...] = k.astype(jnp.bfloat16)
        v_vmem[...] = v.astype(jnp.bfloat16)

    # ---- Q projection for this query tile only -------------------------------
    q_start = pl.multiple_of(i * block_q, block_q)
    hq16 = hs_ref[pl.ds(q_start, block_q), :].astype(jnp.bfloat16)
    q = jnp.dot(hq16, wq_ref[...], preferred_element_type=jnp.float32) + bq_ref[...]
    # Fold 1/sqrt(head_dim) into q (O(block_q*H)) instead of scaling scores.
    qh = (q * scale).reshape(block_q, num_heads, head_dim).astype(jnp.bfloat16)

    # ---- online-softmax attention over key tiles ------------------------------
    def attend(k_start, carry):
        m, l, acc = carry
        kh = k_vmem[pl.ds(k_start, block_k), :].reshape(block_k, num_heads, head_dim)
        vh = v_vmem[pl.ds(k_start, block_k), :].reshape(block_k, num_heads, head_dim)
        mask_blk = mask_ref[:, pl.ds(k_start, block_k)]           # (1, block_k)
        s = jnp.einsum('qhd,khd->hqk', qh, kh,
                       preferred_element_type=jnp.float32)
        s = s + mask_blk[None, :, :]                              # (h, q, k) fp32
        m_new = jnp.maximum(m, s.max(axis=-1, keepdims=True))
        alpha = jnp.exp(m - m_new)
        p = jnp.exp(s - m_new)
        l_new = alpha * l + p.sum(axis=-1, keepdims=True)
        acc_new = alpha * acc + jnp.einsum(
            'hqk,khd->hqd', p.astype(jnp.bfloat16), vh,
            preferred_element_type=jnp.float32)
        return m_new, l_new, acc_new

    init = (
        jnp.full((num_heads, block_q, 1), -jnp.inf, jnp.float32),
        jnp.zeros((num_heads, block_q, 1), jnp.float32),
        jnp.zeros((num_heads, block_q, head_dim), jnp.float32),
    )
    if num_k_tiles == 1:
        m, l, acc = attend(0, init)
    else:
        m, l, acc = lax.fori_loop(
            0, num_k_tiles,
            lambda kt, c: attend(pl.multiple_of(kt * block_k, block_k), c),
            init)

    # NOTE: attention-prob dropout is identity (inference semantics).
    ctx = acc * pl.reciprocal(l, approx=True)                     # (h, q, d)
    # TODO(synk): v6e layout audit — head_dim contractions underfill the
    # 256-deep MXU; pair heads / use pltpu.einshape if the bundle dump shows
    # relayout copies around these reshapes.
    ctx = jnp.transpose(ctx, (1, 0, 2)).reshape(block_q, num_heads * head_dim)
    out_ref[...] = ctx.astype(out_ref.dtype)


# -----------------------------------------------------------------------------
# Wrapper
# -----------------------------------------------------------------------------
def _pick_block(n, candidates):
    for c in candidates:
        if c <= n and n % c == 0:
            return c
    return n


def _vmem_capacity_bytes():
    try:
        return int(pltpu.get_tpu_info().vmem_capacity_bytes)
    except Exception:
        return 64 * 1024 * 1024   # conservative fallback (v7x per-TC)


def bert_self_attention(hidden_states, attention_mask, params, *, num_heads,
                        out_dtype=jnp.float32):
    """hidden_states: (B, S, H) fp32 (bf16 also accepted).
       attention_mask: (B, 1, 1, S) additive extended mask (0 / -10000).
       Returns context_layer: (B, S, H) in `out_dtype` (pass bf16 if the
       downstream output-dense layer accepts it to halve the write-back)."""
    B, S, H = hidden_states.shape
    head_dim = H // num_heads

    vmem_cap = _vmem_capacity_bytes()

    block_q = _pick_block(S, (256, 128))
    block_k = _pick_block(S, (512, 256, 128))
    # Generation/shape-aware cap: keep the per-tile softmax working set
    # (~3 * heads * block_q * block_k * 4B) well inside scoped VMEM (v7x 64MiB).
    while (block_q > 128 and S % (block_q // 2) == 0 and
           3 * num_heads * block_q * block_k * 4 > vmem_cap // 8):
        block_q //= 2
    num_q_tiles = S // block_q

    # --- explicit VMEM budget (feedback: actually set vmem_limit_bytes) ------
    est = 0
    est += 2 * S * H * 4                       # full-seq block (dbl-buffered over b)
    est += 2 * S * 4                           # mask block
    est += 3 * H * H * 2 + 3 * H * 4           # weights (bf16, single-buffered) + biases
    est += 2 * block_q * H * 4                 # output tile (double-buffered)
    est += 2 * S * H * 2                       # K / V bf16 scratch
    est += 2 * block_q * H * 4                 # q / qh live values
    est += 3 * num_heads * block_q * block_k * 4        # scores / exp / probs tile
    est += num_heads * block_q * (head_dim + 4) * 4     # (m, l, acc) carries
    vmem_limit = max(16 << 20, min(int(1.5 * est) + (4 << 20), int(0.9 * vmem_cap)))

    mask3d = attention_mask.reshape(B, 1, S).astype(jnp.float32)

    # bf16 weights: native MXU operand format, halves resident weight VMEM.
    wq = params["wq"].astype(jnp.bfloat16)
    wk = params["wk"].astype(jnp.bfloat16)
    wv = params["wv"].astype(jnp.bfloat16)
    # Biases as (1, H) rows -> pure sublane broadcast in the kernel.
    bq = params["bq"].reshape(1, H).astype(jnp.float32)
    bk = params["bk"].reshape(1, H).astype(jnp.float32)
    bv = params["bv"].reshape(1, H).astype(jnp.float32)

    kernel = functools.partial(
        _bert_self_attn_kernel,
        num_heads=num_heads, head_dim=head_dim,
        scale=1.0 / math.sqrt(head_dim),
        block_q=block_q, block_k=block_k,
    )

    sq = pl.Squeezed()   # squeeze the leading batch dim out of the kernel Refs

    def const_spec(shape):
        # Weights / biases never change -> single buffer (no wasted 2nd copy).
        return pl.BlockSpec(shape, lambda b, i: (0, 0),
                            pipeline_mode=pl.Buffered(1))

    in_specs = [
        # Full sequence once per batch element; block index is constant in i,
        # so Pallas keeps it resident instead of re-fetching per query tile.
        pl.BlockSpec((sq, S, H), lambda b, i: (b, 0, 0)),
        pl.BlockSpec((sq, 1, S), lambda b, i: (b, 0, 0)),        # additive mask
        const_spec((H, H)), const_spec((1, H)),                  # wq, bq
        const_spec((H, H)), const_spec((1, H)),                  # wk, bk
        const_spec((H, H)), const_spec((1, H)),                  # wv, bv
    ]
    out_spec = pl.BlockSpec((sq, block_q, H), lambda b, i: (b, i, 0))

    fn = pl.pallas_call(
        kernel,
        out_shape=jax.ShapeDtypeStruct((B, S, H), out_dtype),
        grid_spec=pltpu.PrefetchScalarGridSpec(
            num_scalar_prefetch=0,
            grid=(B, num_q_tiles),
            in_specs=in_specs,
            out_specs=out_spec,
            scratch_shapes=[
                pltpu.VMEM((S, H), jnp.bfloat16),   # projected K (per batch element)
                pltpu.VMEM((S, H), jnp.bfloat16),   # projected V (per batch element)
            ],
        ),
        compiler_params=pltpu.CompilerParams(
            # b is "parallel" (megacore / v7x 2 TCs); i must be "arbitrary"
            # because the K/V scratch is carried across query tiles.
            # TODO(synk): at B == 1 on v7x, add a head-group parallel axis so
            # both TensorCores stay busy.
            dimension_semantics=("parallel", "arbitrary"),
            vmem_limit_bytes=vmem_limit,
        ),
    )

    return fn(hidden_states, mask3d, wq, bq, wk, bk, wv, bv)


# -----------------------------------------------------------------------------
# Pure-JAX fp32 reference (mirrors the PyTorch forward, dropout = identity)
# -----------------------------------------------------------------------------
def reference(hidden_states, attention_mask, params, *, num_heads):
    B, S, H = hidden_states.shape
    d = H // num_heads
    q = hidden_states @ params["wq"] + params["bq"]
    k = hidden_states @ params["wk"] + params["bk"]
    v = hidden_states @ params["wv"] + params["bv"]
    q = q.reshape(B, S, num_heads, d).transpose(0, 2, 1, 3)
    k = k.reshape(B, S, num_heads, d).transpose(0, 2, 1, 3)
    v = v.reshape(B, S, num_heads, d).transpose(0, 2, 1, 3)
    scores = jnp.einsum('bhqd,bhkd->bhqk', q, k) / math.sqrt(d) + attention_mask
    probs = jax.nn.softmax(scores, axis=-1)
    ctx = jnp.einsum('bhqk,bhkd->bhqd', probs, v)
    return ctx.transpose(0, 2, 1, 3).reshape(B, S, H)


# -----------------------------------------------------------------------------
# Main
# -----------------------------------------------------------------------------
if __name__ == "__main__":
    B, S, H, NH = 2, 8, 32, 4

    key = jax.random.PRNGKey(0)
    keys = jax.random.split(key, 10)

    def init(k, shape, scale=0.02):
        return (scale * jax.random.normal(k, shape)).astype(jnp.float32)

    params = {
        "wq": init(keys[0], (H, H)), "bq": init(keys[1], (H,)),
        "wk": init(keys[2], (H, H)), "bk": init(keys[3], (H,)),
        "wv": init(keys[4], (H, H)), "bv": init(keys[5], (H,)),
    }

    hidden_states = jax.random.normal(keys[6], (B, S, H), jnp.float32)
    # additive extended attention mask: 0 for attend, -10000 for masked
    keep = jax.random.bernoulli(keys[7], p=0.8, shape=(B, 1, 1, S))
    attention_mask = jnp.where(keep, 0.0, -10000.0).astype(jnp.float32)

    out = bert_self_attention(hidden_states, attention_mask, params, num_heads=NH)
    out = jax.block_until_ready(out)

    ref = reference(hidden_states, attention_mask, params, num_heads=NH)
    assert out.shape == (B, S, H)
    # bf16 MXU operands + approx reciprocal -> relaxed tolerance vs fp32 ref.
    assert jnp.allclose(out, ref, atol=2e-2, rtol=2e-2), "mismatch vs reference"

    print("KERNEL_OK")
</pallas_src>

<mosaic_0001>
module attributes {stable_mosaic.version = 11 : i64} {
  func.func @_bert_self_attn_kernel(%arg0: i32, %arg1: i32, %arg2: memref<1x8x32xf32, #tpu.memory_space<vmem>>, %arg3: memref<1x1x8xf32, #tpu.memory_space<vmem>>, %arg4: memref<32x32xbf16, #tpu.memory_space<vmem>>, %arg5: memref<1x32xf32, #tpu.memory_space<vmem>>, %arg6: memref<32x32xbf16, #tpu.memory_space<vmem>>, %arg7: memref<1x32xf32, #tpu.memory_space<vmem>>, %arg8: memref<32x32xbf16, #tpu.memory_space<vmem>>, %arg9: memref<1x32xf32, #tpu.memory_space<vmem>>, %arg10: memref<1x8x32xf32, #tpu.memory_space<vmem>>, %arg11: memref<8x32xbf16, #tpu.memory_space<vmem>>, %arg12: memref<8x32xbf16, #tpu.memory_space<vmem>>) attributes {dimension_semantics = [#tpu.dimension_semantics<parallel>, #tpu.dimension_semantics<arbitrary>], iteration_bounds = array<i64: 2, 1>, scalar_prefetch = 0 : i64, scratch_operands = 2 : i64, tpu.core_type = #tpu.core_type<tc>, window_params = [{transform_indices = @transform_0, window_bounds = array<i64: 1, 8, 32>}, {transform_indices = @transform_1, window_bounds = array<i64: 1, 1, 8>}, {pipeline_mode = #tpu.pipeline_mode<synchronous>, transform_indices = @transform_2, window_bounds = array<i64: 32, 32>}, {pipeline_mode = #tpu.pipeline_mode<synchronous>, transform_indices = @transform_3, window_bounds = array<i64: 1, 32>}, {pipeline_mode = #tpu.pipeline_mode<synchronous>, transform_indices = @transform_4, window_bounds = array<i64: 32, 32>}, {pipeline_mode = #tpu.pipeline_mode<synchronous>, transform_indices = @transform_5, window_bounds = array<i64: 1, 32>}, {pipeline_mode = #tpu.pipeline_mode<synchronous>, transform_indices = @transform_6, window_bounds = array<i64: 32, 32>}, {pipeline_mode = #tpu.pipeline_mode<synchronous>, transform_indices = @transform_7, window_bounds = array<i64: 1, 32>}, {transform_indices = @transform_8, window_bounds = array<i64: 1, 8, 32>}]} {
    %c0_i32 = arith.constant 0 : i32
    %0 = arith.cmpi eq, %arg1, %c0_i32 : i32
    %1 = arith.extui %0 : i1 to i32
    %c0_i32_0 = arith.constant 0 : i32
    %2 = arith.cmpi ne, %1, %c0_i32_0 : i32
    scf.if %2 {
      %c0_24 = arith.constant 0 : index
      %c0_25 = arith.constant 0 : index
      %c0_26 = arith.constant 0 : index
      %56 = vector.load %arg2[%c0_24, %c0_25, %c0_26] : memref<1x8x32xf32, #tpu.memory_space<vmem>>, vector<1x8x32xf32>
      %57 = vector.shape_cast %56 : vector<1x8x32xf32> to vector<8x32xf32>
      %58 = arith.truncf %57 : vector<8x32xf32> to vector<8x32xbf16>
      %c0_27 = arith.constant 0 : index
      %c0_28 = arith.constant 0 : index
      %59 = vector.load %arg6[%c0_27, %c0_28] : memref<32x32xbf16, #tpu.memory_space<vmem>>, vector<32x32xbf16>
      %cst_29 = arith.constant dense<0.000000e+00> : vector<8x32xf32>
      %60 = tpu.matmul %58, %59, %cst_29 {dimension_numbers = #tpu.dot_dimension_numbers<[1], [0], [0], [1], [0, 0, 1, 1], [], []>} : vector<8x32xbf16>, vector<32x32xbf16>, vector<8x32xf32> -> vector<8x32xf32>
      %c0_30 = arith.constant 0 : index
      %c0_31 = arith.constant 0 : index
      %61 = vector.load %arg7[%c0_30, %c0_31] : memref<1x32xf32, #tpu.memory_space<vmem>>, vector<1x32xf32>
      %62 = vector.broadcast %61 : vector<1x32xf32> to vector<8x32xf32>
      %63 = arith.addf %60, %62 : vector<8x32xf32>
      %c0_32 = arith.constant 0 : index
      %c0_33 = arith.constant 0 : index
      %64 = vector.load %arg8[%c0_32, %c0_33] : memref<32x32xbf16, #tpu.memory_space<vmem>>, vector<32x32xbf16>
      %cst_34 = arith.constant dense<0.000000e+00> : vector<8x32xf32>
      %65 = tpu.matmul %58, %64, %cst_34 {dimension_numbers = #tpu.dot_dimension_numbers<[1], [0], [0], [1], [0, 0, 1, 1], [], []>} : vector<8x32xbf16>, vector<32x32xbf16>, vector<8x32xf32> -> vector<8x32xf32>
      %c0_35 = arith.constant 0 : index
      %c0_36 = arith.constant 0 : index
      %66 = vector.load %arg9[%c0_35, %c0_36] : memref<1x32xf32, #tpu.memory_space<vmem>>, vector<1x32xf32>
      %67 = vector.broadcast %66 : vector<1x32xf32> to vector<8x32xf32>
      %68 = arith.addf %65, %67 : vector<8x32xf32>
      %69 = arith.truncf %63 : vector<8x32xf32> to vector<8x32xbf16>
      %c0_37 = arith.constant 0 : index
      %c0_38 = arith.constant 0 : index
      %70 = vector.load %arg11[%c0_37, %c0_38] : memref<8x32xbf16, #tpu.memory_space<vmem>>, vector<8x32xbf16>
      tpu.vector_store %arg11[%c0_37, %c0_38], %69 {strides = array<i32>} : memref<8x32xbf16, #tpu.memory_space<vmem>>, vector<8x32xbf16>,
      %71 = arith.truncf %68 : vector<8x32xf32> to vector<8x32xbf16>
      %c0_39 = arith.constant 0 : index
      %c0_40 = arith.constant 0 : index
      %72 = vector.load %arg12[%c0_39, %c0_40] : memref<8x32xbf16, #tpu.memory_space<vmem>>, vector<8x32xbf16>
      tpu.vector_store %arg12[%c0_39, %c0_40], %71 {strides = array<i32>} : memref<8x32xbf16, #tpu.memory_space<vmem>>, vector<8x32xbf16>,
    } else {
    }
    %c8_i32 = arith.constant 8 : i32
    %3 = arith.muli %arg1, %c8_i32 : i32
    %4 = tpu.assume_multiple %3, 8 : i32
    %c0 = arith.constant 0 : index
    %5 = arith.index_cast %4 : i32 to index
    %c0_1 = arith.constant 0 : index
    %6 = vector.load %arg2[%c0, %5, %c0_1] : memref<1x8x32xf32, #tpu.memory_space<vmem>>, vector<1x8x32xf32>
    %7 = vector.shape_cast %6 : vector<1x8x32xf32> to vector<8x32xf32>
    %8 = arith.truncf %7 : vector<8x32xf32> to vector<8x32xbf16>
    %c0_2 = arith.constant 0 : index
    %c0_3 = arith.constant 0 : index
    %9 = vector.load %arg4[%c0_2, %c0_3] : memref<32x32xbf16, #tpu.memory_space<vmem>>, vector<32x32xbf16>
    %cst = arith.constant dense<0.000000e+00> : vector<8x32xf32>
    %10 = tpu.matmul %8, %9, %cst {dimension_numbers = #tpu.dot_dimension_numbers<[1], [0], [0], [1], [0, 0, 1, 1], [], []>} : vector<8x32xbf16>, vector<32x32xbf16>, vector<8x32xf32> -> vector<8x32xf32>
    %c0_4 = arith.constant 0 : index
    %c0_5 = arith.constant 0 : index
    %11 = vector.load %arg5[%c0_4, %c0_5] : memref<1x32xf32, #tpu.memory_space<vmem>>, vector<1x32xf32>
    %12 = vector.broadcast %11 : vector<1x32xf32> to vector<8x32xf32>
    %13 = arith.addf %10, %12 : vector<8x32xf32>
    %cst_6 = arith.constant 0.353553385 : f32
    %14 = vector.broadcast %cst_6 : f32 to vector<8x32xf32>
    %15 = arith.mulf %13, %14 : vector<8x32xf32>
    %16 = vector.shape_cast %15 : vector<8x32xf32> to vector<8x4x8xf32>
    %17 = arith.truncf %16 : vector<8x4x8xf32> to vector<8x4x8xbf16>
    %cst_7 = arith.constant 0xFF800000 : f32
    %18 = vector.broadcast %cst_7 : f32 to vector<4x8x1xf32>
    %cst_8 = arith.constant 0.000000e+00 : f32
    %19 = vector.broadcast %cst_8 : f32 to vector<4x8x1xf32>
    %cst_9 = arith.constant 0.000000e+00 : f32
    %20 = vector.broadcast %cst_9 : f32 to vector<4x8x8xf32>
    %c0_10 = arith.constant 0 : index
    %c0_11 = arith.constant 0 : index
    %21 = vector.load %arg11[%c0_10, %c0_11] : memref<8x32xbf16, #tpu.memory_space<vmem>>, vector<8x32xbf16>
    %22 = vector.shape_cast %21 : vector<8x32xbf16> to vector<8x4x8xbf16>
    %c0_12 = arith.constant 0 : index
    %c0_13 = arith.constant 0 : index
    %23 = vector.load %arg12[%c0_12, %c0_13] : memref<8x32xbf16, #tpu.memory_space<vmem>>, vector<8x32xbf16>
    %24 = vector.shape_cast %23 : vector<8x32xbf16> to vector<8x4x8xbf16>
    %c0_14 = arith.constant 0 : index
    %c0_15 = arith.constant 0 : index
    %c0_16 = arith.constant 0 : index
    %25 = vector.load %arg3[%c0_14, %c0_15, %c0_16] : memref<1x1x8xf32, #tpu.memory_space<vmem>>, vector<1x1x8xf32>
    %26 = vector.shape_cast %25 : vector<1x1x8xf32> to vector<1x8xf32>
    "tpu.trace_start"() <{level = 10 : i32, message = "qhd,khd->hqk"}> : () -> ()
    %cst_17 = arith.constant dense<0.000000e+00> : vector<4x8x8xf32>
    %27 = tpu.matmul %17, %22, %cst_17 {dimension_numbers = #tpu.dot_dimension_numbers<[2], [2], [0], [0], [0, 1, 0, 0, 1, 0], [1], [1]>} : vector<8x4x8xbf16>, vector<8x4x8xbf16>, vector<4x8x8xf32> -> vector<4x8x8xf32>
    "tpu.trace_stop"() : () -> ()
    %28 = vector.shape_cast %26 : vector<1x8xf32> to vector<1x1x8xf32>
    %29 = vector.broadcast %28 : vector<1x1x8xf32> to vector<4x8x8xf32>
    %30 = arith.addf %27, %29 : vector<4x8x8xf32>
    %cst_18 = arith.constant dense<0xFF800000> : vector<4x8xf32>
    %31 = vector.multi_reduction <maximumf>, %30, %cst_18 [2] : vector<4x8x8xf32> to vector<4x8xf32>
    %32 = vector.shape_cast %31 : vector<4x8xf32> to vector<4x8x1xf32>
    %33 = arith.maximumf %18, %32 : vector<4x8x1xf32>
    %34 = arith.subf %18, %33 : vector<4x8x1xf32>
    %35 = math.exp %34 : vector<4x8x1xf32>
    %36 = vector.broadcast %33 : vector<4x8x1xf32> to vector<4x8x8xf32>
    %37 = arith.subf %30, %36 : vector<4x8x8xf32>
    %38 = math.exp %37 : vector<4x8x8xf32>
    %39 = arith.mulf %35, %19 : vector<4x8x1xf32>
    %cst_19 = arith.constant dense<0.000000e+00> : vector<4x8xf32>
    %40 = vector.multi_reduction <add>, %38, %cst_19 [2] : vector<4x8x8xf32> to vector<4x8xf32>
    %41 = vector.shape_cast %40 : vector<4x8xf32> to vector<4x8x1xf32>
    %42 = arith.addf %39, %41 : vector<4x8x1xf32>
    %43 = vector.broadcast %35 : vector<4x8x1xf32> to vector<4x8x8xf32>
    %44 = arith.mulf %43, %20 : vector<4x8x8xf32>
    %45 = arith.truncf %38 : vector<4x8x8xf32> to vector<4x8x8xbf16>
    "tpu.trace_start"() <{level = 10 : i32, message = "hqk,khd->hqd"}> : () -> ()
    %cst_20 = arith.constant dense<0.000000e+00> : vector<4x8x8xf32>
    %46 = tpu.matmul %45, %24, %cst_20 {dimension_numbers = #tpu.dot_dimension_numbers<[2], [0], [1], [2], [0, 0, 0, 1, 1, 2], [0], [1]>} : vector<4x8x8xbf16>, vector<8x4x8xbf16>, vector<4x8x8xf32> -> vector<4x8x8xf32>
    "tpu.trace_stop"() : () -> ()
    %47 = arith.addf %44, %46 : vector<4x8x8xf32>
    %48 = tpu.reciprocal %42 {approx = true} : vector<4x8x1xf32> -> vector<4x8x1xf32>
    %49 = vector.broadcast %48 : vector<4x8x1xf32> to vector<4x8x8xf32>
    %50 = arith.mulf %47, %49 : vector<4x8x8xf32>
    %51 = tpu.transpose %50, [1, 0, 2] : vector<4x8x8xf32> -> vector<8x4x8xf32>
    %52 = vector.shape_cast %51 : vector<8x4x8xf32> to vector<8x32xf32>
    %c0_21 = arith.constant 0 : index
    %c0_22 = arith.constant 0 : index
    %c0_23 = arith.constant 0 : index
    %53 = vector.load %arg10[%c0_21, %c0_22, %c0_23] : memref<1x8x32xf32, #tpu.memory_space<vmem>>, vector<1x8x32xf32>
    %54 = vector.shape_cast %53 : vector<1x8x32xf32> to vector<8x32xf32>
    %55 = vector.shape_cast %52 : vector<8x32xf32> to vector<1x8x32xf32>
    tpu.vector_store %arg10[%c0_21, %c0_22, %c0_23], %55 {strides = array<i32>} : memref<1x8x32xf32, #tpu.memory_space<vmem>>, vector<1x8x32xf32>,
    return
  }
  func.func @transform_0(%arg0: i32, %arg1: i32) -> (i32, i32, i32) {
    %c0_i32 = arith.constant 0 : i32
    %c0_i32_0 = arith.constant 0 : i32
    %c0_i32_1 = arith.constant 0 : i32
    return %arg0, %c0_i32, %c0_i32_0 : i32, i32, i32
  }
  func.func @transform_1(%arg0: i32, %arg1: i32) -> (i32, i32, i32) {
    %c0_i32 = arith.constant 0 : i32
    %c0_i32_0 = arith.constant 0 : i32
    %c0_i32_1 = arith.constant 0 : i32
    return %arg0, %c0_i32, %c0_i32_0 : i32, i32, i32
  }
  func.func @transform_2(%arg0: i32, %arg1: i32) -> (i32, i32) {
    %c0_i32 = arith.constant 0 : i32
    %c0_i32_0 = arith.constant 0 : i32
    %c0_i32_1 = arith.constant 0 : i32
    return %c0_i32, %c0_i32_0 : i32, i32
  }
  func.func @transform_3(%arg0: i32, %arg1: i32) -> (i32, i32) {
    %c0_i32 = arith.constant 0 : i32
    %c0_i32_0 = arith.constant 0 : i32
    %c0_i32_1 = arith.constant 0 : i32
    return %c0_i32, %c0_i32_0 : i32, i32
  }
  func.func @transform_4(%arg0: i32, %arg1: i32) -> (i32, i32) {
    %c0_i32 = arith.constant 0 : i32
    %c0_i32_0 = arith.constant 0 : i32
    %c0_i32_1 = arith.constant 0 : i32
    return %c0_i32, %c0_i32_0 : i32, i32
  }
  func.func @transform_5(%arg0: i32, %arg1: i32) -> (i32, i32) {
    %c0_i32 = arith.constant 0 : i32
    %c0_i32_0 = arith.constant 0 : i32
    %c0_i32_1 = arith.constant 0 : i32
    return %c0_i32, %c0_i32_0 : i32, i32
  }
  func.func @transform_6(%arg0: i32, %arg1: i32) -> (i32, i32) {
    %c0_i32 = arith.constant 0 : i32
    %c0_i32_0 = arith.constant 0 : i32
    %c0_i32_1 = arith.constant 0 : i32
    return %c0_i32, %c0_i32_0 : i32, i32
  }
  func.func @transform_7(%arg0: i32, %arg1: i32) -> (i32, i32) {
    %c0_i32 = arith.constant 0 : i32
    %c0_i32_0 = arith.constant 0 : i32
    %c0_i32_1 = arith.constant 0 : i32
    return %c0_i32, %c0_i32_0 : i32, i32
  }
  func.func @transform_8(%arg0: i32, %arg1: i32) -> (i32, i32, i32) {
    %c0_i32 = arith.constant 0 : i32
    %c0_i32_0 = arith.constant 0 : i32
    return %arg0, %arg1, %c0_i32 : i32, i32, i32
  }
}

</mosaic_0001>

<llo_original>
// kernel: tpu_custom_call.1
$region0: #{tpu_custom_call.1}
  #allocation0 [shape = 'u32[]', space=smem, size = 0x4, offset = 0x4, fixed_abs, tag = 'smem constant byte address 0x4 - core index']
  #allocation1 [shape = 'u32[144,128]{1,0:T(1,128)}', space=vmem, size = 0x12000, scoped, tag = 'internal scratch']
  #allocation2 [shape = 'bf16[8,32]{1,0:T(8,128)(2,1)}', space=vmem, size = 0x800, scoped, tag = 'scratch operand']
  #allocation3 [shape = 'bf16[8,32]{1,0:T(8,128)(2,1)}', space=vmem, size = 0x800, scoped, tag = 'scratch operand']
  %s0 = inlined_call_operand.hbm [shape: f32[2,8,32], index: 0, kind: input, shape index: {}]
  %s1 = inlined_call_operand.vmem [shape: f32[2,1,8], index: 1, kind: input, shape index: {}]
  %s2 = inlined_call_operand.hbm [shape: bf16[32,32], index: 2, kind: input, shape index: {}]
  %s3 = inlined_call_operand.vmem [shape: f32[1,32], index: 3, kind: input, shape index: {}]
  %s4 = inlined_call_operand.hbm [shape: bf16[32,32], index: 4, kind: input, shape index: {}]
  %s5 = inlined_call_operand.vmem [shape: f32[1,32], index: 5, kind: input, shape index: {}]
  %s6 = inlined_call_operand.vmem [shape: bf16[32,32], index: 6, kind: input, shape index: {}]
  %s7 = inlined_call_operand.vmem [shape: f32[1,32], index: 7, kind: input, shape index: {}]
  %s8 = inlined_call_operand.hbm [shape: f32[2,8,32], index: 8, kind: output, shape index: {}]
  %s9 = sld [smem:[#allocation0]]
  $region81: #{tpu_custom_call.1} parent=0
    _
  %s11 = ssub.s32 1, %s9
  %s12 = scalar_select 0, %s11, %s9
  $region1: #{tpu_custom_call.1} parent=0
    #allocation4 [shape = 'u8[8192]{0}', space=vmem, size = 0x2000, scoped, tag = 'input window, operand 0']
    #allocation5 [shape = 's32[2]{0}', space=sflag, size = 0x8, scoped, tag = 'scoped memory for tpu_custom_call.1']
    #allocation6 [shape = 's32[2]{0}', space=sflag, size = 0x8, scoped, tag = 'scoped memory for tpu_custom_call.1']
    #allocation7 [shape = 'u8[8192]{0}', space=vmem, size = 0x2000, scoped, tag = 'input window, operand 2, single buffered']
    #allocation8 [shape = 's32[1]{0}', space=sflag, size = 0x4, scoped, tag = 'scoped memory for tpu_custom_call.1']
    #allocation9 [shape = 'u8[8192]{0}', space=vmem, size = 0x2000, scoped, tag = 'input window, operand 4, single buffered']
    #allocation10 [shape = 'u8[8192]{0}', space=vmem, size = 0x2000, scoped, tag = 'output window, operand 0']
    %13 = vsyncpa [#allocation5], 0
    %s14 = scalar_lea.sflag [#allocation5], 1
    %15 = vsyncpa %s14, 0
    %16 = vsyncpa [#allocation8], 0
    %17 = vsyncpa [#allocation6], 0
    %s18 = scalar_lea.sflag [#allocation6], 1
    %19 = vsyncpa %s18, 0
    loop: start=0, step=1, limit=4
    $region2: #{tpu_custom_call.1} parent=1 // loop_pre_header
      _
    $region3: #{tpu_custom_call.1} parent=1 // loop_header
      %s21 = sphi 0, %s25
      %p22 = scmp.ge.s32.totalorder %s21, 4
      %s28 = sphi 0, %s40
      %s29 = sphi 0, %s36
      %s30 = sphi 0, %s28
      %s31 = sphi 0, %s29
      %s32 = sphi 0, %s30
      %s33 = sphi 0, %s31
      %s43 = sphi 0, %s45
      %s46 = sphi 0, %s43
      %s47 = sphi 0, %s46
      %s63 = sphi 0, %s47
      %s69 = sphi 0, %s71
      %s72 = sphi 0, %s69
      %s73 = sphi 0, %s72
      %s89 = sphi 0, %s73
      %s93 = sphi 0, %s93
      %s95 = sphi 0, %s93
      %s96 = sphi 0, %s95
      %s110 = sphi 0, %s96
      %s114 = sphi 0, %s114
      %s116 = sphi 0, %s114
      %s117 = sphi 0, %s116
      %s131 = sphi 0, %s117
      %s135 = sphi 0, %s135
      %s137 = sphi 0, %s135
      %s138 = sphi 0, %s137
      %s152 = sphi 0, %s138
      %s156 = sphi 0, %s156
      %s158 = sphi 0, %s156
      %s159 = sphi 0, %s158
      %s173 = sphi 0, %s159
      %s177 = sphi 0, %s177
      %s179 = sphi 0, %s177
      %s180 = sphi 0, %s179
      %s194 = sphi 0, %s180
      %s198 = sphi 0, %s198
      %s200 = sphi 0, %s198
      %s201 = sphi 0, %s200
      %s215 = sphi 0, %s201
      %s223 = sphi 0, %s225
      %s226 = sphi 0, %s223
      %s227 = sphi 0, %s226
      %s243 = sphi 0, %s227
    $region4: #{tpu_custom_call.1} parent=1 // loop_header_branch
      %24 = sbr.rel (%p22) target = $region8
    $region5: #{tpu_custom_call.1} parent=1 // loop_body
      %s26 = ssub.s32 %s21, 1
      %s27 = ssub.s32 %s21, 2
      %s34 = sadd.s32 1, %s29
      %p35 = scmp.ge.s32.totalorder %s34, 1
      %s36 = scalar_select %p35, 0, %s34
      %s37 = sadd.s32 1, %s28
      %s38 = scalar_select %p35, %s37, %s28
      %p39 = scmp.ge.s32.totalorder %s38, 2
      %s40 = scalar_select %p39, 0, %s38
      %s41 = ssub.s32 %s28, %s40
      %p42 = scmp.eq.s32.totalorder %s41, 0
      %s44 = sadd.s32 %s43, 1
      %s45 = scalar_select %p42, %s43, %s44
      %p48 = pneg %p42
      %p49 = scmp.eq.s32.totalorder %s21, 1
      %p50 = por %p48, %p49
      %p51 = scmp.ne.s32.totalorder %s43, %s46
      %p52 = scmp.eq.s32.totalorder %s21, 0
      %p53 = por %p51, %p52
      %p54 = scmp.ne.s32.totalorder %s43, %s46
      %p55 = scmp.eq.s32.totalorder %s26, 1
      %p56 = por %p54, %p55
      %p57 = scmp.ne.s32.totalorder %s46, %s47
      %p58 = scmp.eq.s32.totalorder %s26, 0
      %p59 = por %p57, %p58
      %p60 = scmp.ne.s32.totalorder %s46, %s47
      %p61 = scmp.eq.s32.totalorder %s27, 1
      %p62 = por %p60, %p61
      %p64 = scmp.ne.s32.totalorder %s47, %s63
      %p65 = scmp.eq.s32.totalorder %s27, 0
      %p66 = por %p64, %p65
      %s67 = ssub.s32 %s28, %s40
      %p68 = scmp.eq.s32.totalorder %s67, 0
      %s70 = sadd.s32 %s69, 1
      %s71 = scalar_select %p68, %s69, %s70
      %p74 = pneg %p68
      %p75 = scmp.eq.s32.totalorder %s21, 1
      %p76 = por %p74, %p75
      %p77 = scmp.ne.s32.totalorder %s69, %s72
      %p78 = scmp.eq.s32.totalorder %s21, 0
      %p79 = por %p77, %p78
      %p80 = scmp.ne.s32.totalorder %s69, %s72
      %p81 = scmp.eq.s32.totalorder %s26, 1
      %p82 = por %p80, %p81
      %p83 = scmp.ne.s32.totalorder %s72, %s73
      %p84 = scmp.eq.s32.totalorder %s26, 0
      %p85 = por %p83, %p84
      %p86 = scmp.ne.s32.totalorder %s72, %s73
      %p87 = scmp.eq.s32.totalorder %s27, 1
      %p88 = por %p86, %p87
      %p90 = scmp.ne.s32.totalorder %s73, %s89
      %p91 = scmp.eq.s32.totalorder %s27, 0
      %p92 = por %p90, %p91
      %s94 = sadd.s32 %s93, 1
      %p97 = scmp.eq.s32.totalorder %s21, 1
      %p98 = scmp.ne.s32.totalorder %s93, %s95
      %p99 = scmp.eq.s32.totalorder %s21, 0
      %p100 = por %p98, %p99
      %p101 = scmp.ne.s32.totalorder %s93, %s95
      %p102 = scmp.eq.s32.totalorder %s26, 1
      %p103 = por %p101, %p102
      %p104 = scmp.ne.s32.totalorder %s95, %s96
      %p105 = scmp.eq.s32.totalorder %s26, 0
      %p106 = por %p104, %p105
      %p107 = scmp.ne.s32.totalorder %s95, %s96
      %p108 = scmp.eq.s32.totalorder %s27, 1
      %p109 = por %p107, %p108
      %p111 = scmp.ne.s32.totalorder %s96, %s110
      %p112 = scmp.eq.s32.totalorder %s27, 0
      %p113 = por %p111, %p112
      %s115 = sadd.s32 %s114, 1
      %p118 = scmp.eq.s32.totalorder %s21, 1
      %p119 = scmp.ne.s32.totalorder %s114, %s116
      %p120 = scmp.eq.s32.totalorder %s21, 0
      %p121 = por %p119, %p120
      %p122 = scmp.ne.s32.totalorder %s114, %s116
      %p123 = scmp.eq.s32.totalorder %s26, 1
      %p124 = por %p122, %p123
      %p125 = scmp.ne.s32.totalorder %s116, %s117
      %p126 = scmp.eq.s32.totalorder %s26, 0
      %p127 = por %p125, %p126
      %p128 = scmp.ne.s32.totalorder %s116, %s117
      %p129 = scmp.eq.s32.totalorder %s27, 1
      %p130 = por %p128, %p129
      %p132 = scmp.ne.s32.totalorder %s117, %s131
      %p133 = scmp.eq.s32.totalorder %s27, 0
      %p134 = por %p132, %p133
      %s136 = sadd.s32 %s135, 1
      %p139 = scmp.eq.s32.totalorder %s21, 1
      %p140 = scmp.ne.s32.totalorder %s135, %s137
      %p141 = scmp.eq.s32.totalorder %s21, 0
      %p142 = por %p140, %p141
      %p143 = scmp.ne.s32.totalorder %s135, %s137
      %p144 = scmp.eq.s32.totalorder %s26, 1
      %p145 = por %p143, %p144
      %p146 = scmp.ne.s32.totalorder %s137, %s138
      %p147 = scmp.eq.s32.totalorder %s26, 0
      %p148 = por %p146, %p147
      %p149 = scmp.ne.s32.totalorder %s137, %s138
      %p150 = scmp.eq.s32.totalorder %s27, 1
      %p151 = por %p149, %p150
      %p153 = scmp.ne.s32.totalorder %s138, %s152
      %p154 = scmp.eq.s32.totalorder %s27, 0
      %p155 = por %p153, %p154
      %s157 = sadd.s32 %s156, 1
      %p160 = scmp.eq.s32.totalorder %s21, 1
      %p161 = scmp.ne.s32.totalorder %s156, %s158
      %p162 = scmp.eq.s32.totalorder %s21, 0
      %p163 = por %p161, %p162
      %p164 = scmp.ne.s32.totalorder %s156, %s158
      %p165 = scmp.eq.s32.totalorder %s26, 1
      %p166 = por %p164, %p165
      %p167 = scmp.ne.s32.totalorder %s158, %s159
      %p168 = scmp.eq.s32.totalorder %s26, 0
      %p169 = por %p167, %p168
      %p170 = scmp.ne.s32.totalorder %s158, %s159
      %p171 = scmp.eq.s32.totalorder %s27, 1
      %p172 = por %p170, %p171
      %p174 = scmp.ne.s32.totalorder %s159, %s173
      %p175 = scmp.eq.s32.totalorder %s27, 0
      %p176 = por %p174, %p175
      %s178 = sadd.s32 %s177, 1
      %p181 = scmp.eq.s32.totalorder %s21, 1
      %p182 = scmp.ne.s32.totalorder %s177, %s179
      %p183 = scmp.eq.s32.totalorder %s21, 0
      %p184 = por %p182, %p183
      %p185 = scmp.ne.s32.totalorder %s177, %s179
      %p186 = scmp.eq.s32.totalorder %s26, 1
      %p187 = por %p185, %p186
      %p188 = scmp.ne.s32.totalorder %s179, %s180
      %p189 = scmp.eq.s32.totalorder %s26, 0
      %p190 = por %p188, %p189
      %p191 = scmp.ne.s32.totalorder %s179, %s180
      %p192 = scmp.eq.s32.totalorder %s27, 1
      %p193 = por %p191, %p192
      %p195 = scmp.ne.s32.totalorder %s180, %s194
      %p196 = scmp.eq.s32.totalorder %s27, 0
      %p197 = por %p195, %p196
      %s199 = sadd.s32 %s198, 1
      %p202 = scmp.eq.s32.totalorder %s21, 1
      %p203 = scmp.ne.s32.totalorder %s198, %s200
      %p204 = scmp.eq.s32.totalorder %s21, 0
      %p205 = por %p203, %p204
      %p206 = scmp.ne.s32.totalorder %s198, %s200
      %p207 = scmp.eq.s32.totalorder %s26, 1
      %p208 = por %p206, %p207
      %p209 = scmp.ne.s32.totalorder %s200, %s201
      %p210 = scmp.eq.s32.totalorder %s26, 0
      %p211 = por %p209, %p210
      %p212 = scmp.ne.s32.totalorder %s200, %s201
      %p213 = scmp.eq.s32.totalorder %s27, 1
      %p214 = por %p212, %p213
      %p216 = scmp.ne.s32.totalorder %s201, %s215
      %p217 = scmp.eq.s32.totalorder %s27, 0
      %p218 = por %p216, %p217
      %s219 = ssub.s32 %s28, %s40
      %s220 = ssub.s32 %s29, %s36
      %s221 = sor.u32 %s219, %s220
      %p222 = scmp.eq.s32.totalorder %s221, 0
      %s224 = sadd.s32 %s223, 1
      %s225 = scalar_select %p222, %s223, %s224
      %p228 = pneg %p222
      %p229 = scmp.eq.s32.totalorder %s21, 1
      %p230 = por %p228, %p229
      %p231 = scmp.ne.s32.totalorder %s223, %s226
      %p232 = scmp.eq.s32.totalorder %s21, 0
      %p233 = por %p231, %p232
      %p234 = scmp.ne.s32.totalorder %s223, %s226
      %p235 = scmp.eq.s32.totalorder %s26, 1
      %p236 = por %p234, %p235
      %p237 = scmp.ne.s32.totalorder %s226, %s227
      %p238 = scmp.eq.s32.totalorder %s26, 0
      %p239 = por %p237, %p238
      %p240 = scmp.ne.s32.totalorder %s226, %s227
      %p241 = scmp.eq.s32.totalorder %s27, 1
      %p242 = por %p240, %p241
      %p244 = scmp.ne.s32.totalorder %s227, %s243
      %p245 = scmp.eq.s32.totalorder %s27, 0
      %p246 = por %p244, %p245
      %p247 = scmp.le.s32.totalorder 1, %s21
      %p248 = scmp.lt.s32.totalorder %s21, 3
      %p249 = pnand %p247, %p248
      %p250 = pneg %p249
      // Predicated region
      $region9: #{tpu_custom_call.1} parent=5 // pred_check
        _
      $region10: #{tpu_custom_call.1} parent=5 // pred_check_branch
        %252 = sbr.rel (%p249) target = $region12
      $region11: #{tpu_custom_call.1} parent=5 // pred_region
        %s253 = ssub.s32 %s21, 1
        // Predicated region
        $region13: #{tpu_custom_call.1} parent=11 // pred_check
          %p254 = pneg %p106
        $region14: #{tpu_custom_call.1} parent=11 // pred_check_branch
          %256 = sbr.rel (%p254) target = $region16
        $region15: #{tpu_custom_call.1} parent=11 // pred_region
          %s258 = ssub.s32 256, 256
          %259 = vsyncadd [#allocation8], %s258
          %s260 = sshll.u32 [#allocation7], 4
          %s261 = int_to_ptr.vmem [resolvable:$true] %s260
          %266 = dma.hbm_to_vmem [thread:$0]  %s2, 256, %s261, [#allocation8], 64, 64, 4
        $region16: #{tpu_custom_call.1} parent=11 // pred_fallthru
          _
        // Predicated region
        $region17: #{tpu_custom_call.1} parent=11 // pred_check
          %p267 = pneg %p127
        $region18: #{tpu_custom_call.1} parent=11 // pred_check_branch
          %269 = sbr.rel (%p267) target = $region20
        $region19: #{tpu_custom_call.1} parent=11 // pred_region
          _
        $region20: #{tpu_custom_call.1} parent=11 // pred_fallthru
          _
        // Predicated region
        $region21: #{tpu_custom_call.1} parent=11 // pred_check
          %p270 = pneg %p148
        $region22: #{tpu_custom_call.1} parent=11 // pred_check_branch
          %272 = sbr.rel (%p270) target = $region24
        $region23: #{tpu_custom_call.1} parent=11 // pred_region
          %s274 = ssub.s32 256, 256
          %275 = vsyncadd [#allocation8], %s274
          %s276 = sshll.u32 [#allocation9], 4
          %s277 = int_to_ptr.vmem [resolvable:$true] %s276
          %282 = dma.hbm_to_vmem [thread:$0]  %s4, 256, %s277, [#allocation8], 64, 64, 4
        $region24: #{tpu_custom_call.1} parent=11 // pred_fallthru
          _
        // Predicated region
        $region25: #{tpu_custom_call.1} parent=11 // pred_check
          %p283 = pneg %p169
        $region26: #{tpu_custom_call.1} parent=11 // pred_check_branch
          %285 = sbr.rel (%p283) target = $region28
        $region27: #{tpu_custom_call.1} parent=11 // pred_region
          _
        $region28: #{tpu_custom_call.1} parent=11 // pred_fallthru
          _
        // Predicated region
        $region29: #{tpu_custom_call.1} parent=11 // pred_check
          %p286 = pneg %p190
        $region30: #{tpu_custom_call.1} parent=11 // pred_check_branch
          %288 = sbr.rel (%p286) target = $region32
        $region31: #{tpu_custom_call.1} parent=11 // pred_region
          _
        $region32: #{tpu_custom_call.1} parent=11 // pred_fallthru
          _
        // Predicated region
        $region33: #{tpu_custom_call.1} parent=11 // pred_check
          %p289 = pneg %p211
        $region34: #{tpu_custom_call.1} parent=11 // pred_check_branch
          %291 = sbr.rel (%p289) target = $region36
        $region35: #{tpu_custom_call.1} parent=11 // pred_region
          _
        $region36: #{tpu_custom_call.1} parent=11 // pred_fallthru
          _
      $region12: #{tpu_custom_call.1} parent=5 // pred_fallthru
        _
      %p292 = scmp.lt.s32.totalorder %s21, 2
      // Predicated region
      $region37: #{tpu_custom_call.1} parent=5 // pred_check
        %p293 = pneg %p292
      $region38: #{tpu_custom_call.1} parent=5 // pred_check_branch
        %295 = sbr.rel (%p293) target = $region40
      $region39: #{tpu_custom_call.1} parent=5 // pred_region
        // Predicated region
        $region41: #{tpu_custom_call.1} parent=39 // pred_check
          %p296 = pneg %p53
        $region42: #{tpu_custom_call.1} parent=39 // pred_check_branch
          %298 = sbr.rel (%p296) target = $region44
        $region43: #{tpu_custom_call.1} parent=39 // pred_region
          %s299 = sand.u32 %s43, 1
          %s300 = scalar_lea.sflag [#allocation5], %s299
          %s301 = sand.u32 %s43, 1
          %s302 = smul.addr %s301, 8
          %s303 = scalar_lea.vmem [#allocation4], %s302
          %s305 = ssub.s32 128, 128
          %306 = vsyncadd %s300, %s305
          %s307 = smul.addr %s28, 128
          %s308 = scalar_lea.hbm %s0, %s307
          %s310 = sshll.u32 %s303, 4
          %s311 = int_to_ptr.vmem [resolvable:$true] %s310
          %313 = dma.hbm_to_vmem [thread:$0]  %s308, 128, %s311, %s300
        $region44: #{tpu_custom_call.1} parent=39 // pred_fallthru
          _
        // Predicated region
        $region45: #{tpu_custom_call.1} parent=39 // pred_check
          %p314 = pneg %p79
        $region46: #{tpu_custom_call.1} parent=39 // pred_check_branch
          %316 = sbr.rel (%p314) target = $region48
        $region47: #{tpu_custom_call.1} parent=39 // pred_region
          %p317 = scmp.lt.s32.totalorder %s28, 1
          %s318 = scalar_select %p317, %s28, 1
          %s319 = scalar_lea.vmem %s1, %s318
        $region48: #{tpu_custom_call.1} parent=39 // pred_fallthru
          _
      $region40: #{tpu_custom_call.1} parent=5 // pred_fallthru
        _
      %p320 = scmp.le.s32.totalorder 1, %s21
      %p321 = scmp.lt.s32.totalorder %s21, 3
      %p322 = pnand %p320, %p321
      %p323 = pneg %p322
      // Predicated region
      $region49: #{tpu_custom_call.1} parent=5 // pred_check
        _
      $region50: #{tpu_custom_call.1} parent=5 // pred_check_branch
        %325 = sbr.rel (%p322) target = $region52
      $region51: #{tpu_custom_call.1} parent=5 // pred_region
        %s326 = ssub.s32 %s21, 1
        %s327 = sand.u32 %s46, 1
        %s328 = scalar_lea.sflag [#allocation5], %s327
        %s329 = sand.u32 %s46, 1
        %s330 = smul.addr %s329, 8
        %s331 = scalar_lea.vmem [#allocation4], %s330
        // Predicated region
        $region53: #{tpu_custom_call.1} parent=51 // pred_check
          %p332 = pneg %p59
        $region54: #{tpu_custom_call.1} parent=51 // pred_check_branch
          %334 = sbr.rel (%p332) target = $region56
        $region55: #{tpu_custom_call.1} parent=51 // pred_region
          %335 = dma.done %s328, 128
        $region56: #{tpu_custom_call.1} parent=51 // pred_fallthru
          _
        // Predicated region
        $region57: #{tpu_custom_call.1} parent=51 // pred_check
          %p336 = pneg %p106
        $region58: #{tpu_custom_call.1} parent=51 // pred_check_branch
          %338 = sbr.rel (%p336) target = $region60
        $region59: #{tpu_custom_call.1} parent=51 // pred_region
          %339 = dma.done [#allocation8], 256
        $region60: #{tpu_custom_call.1} parent=51 // pred_fallthru
          _
        // Predicated region
        $region61: #{tpu_custom_call.1} parent=51 // pred_check
          %p340 = pneg %p148
        $region62: #{tpu_custom_call.1} parent=51 // pred_check_branch
          %342 = sbr.rel (%p340) target = $region64
        $region63: #{tpu_custom_call.1} parent=51 // pred_region
          %343 = dma.done [#allocation8], 256
        $region64: #{tpu_custom_call.1} parent=51 // pred_fallthru
          _
        %s344 = sand.u32 %s46, 1
        %s345 = scalar_lea.sflag [#allocation5], %s344
        %s346 = sand.u32 %s46, 1
        %s347 = smul.addr %s346, 8
        %s348 = scalar_lea.vmem [#allocation4], %s347
        %p349 = pneg %p59
        %p350 = pneg %p56
        %p351 = scmp.lt.s32.totalorder %s30, 1
        %s352 = scalar_select %p351, %s30, 1
        %s353 = scalar_lea.vmem %s1, %s352
        %p354 = pneg %p85
        %p355 = pneg %p82
        %p356 = pneg %p106
        %p357 = pneg %p103
        %p358 = pneg %p127
        %p359 = pneg %p124
        %p360 = pneg %p148
        %p361 = pneg %p145
        %p362 = pneg %p169
        %p363 = pneg %p166
        %p364 = pneg %p190
        %p365 = pneg %p187
        %p366 = pneg %p211
        %p367 = pneg %p208
        %p368 = pneg %p239
        %p369 = pneg %p236
        %s370 = sand.u32 %s226, 1
        %s371 = scalar_lea.sflag [#allocation6], %s370
        %s372 = sand.u32 %s226, 1
        %s373 = smul.addr %s372, 8
        %s374 = scalar_lea.vmem [#allocation10], %s373
        %p375 = scmp.lt.s32.totalorder %s30, 1
        %s376 = scalar_select %p375, %s30, 1
        %s377 = scalar_lea.vmem %s1, %s376
        %p379 = scmp.eq.s32.totalorder %s31, 0
        // Predicated region
        $region65: #{tpu_custom_call.1} parent=51 // pred_check
          %p380 = pneg %p379
        $region66: #{tpu_custom_call.1} parent=51 // pred_check_branch
          %382 = sbr.rel (%p380) target = $region68
        $region67: #{tpu_custom_call.1} parent=51 // pred_region
          %v383 = vld [vmem:[%s331] sm:$0xff]
          %v384 = vpack.c.bf16 %v383, %v383
          %v385 = vld [vmem:[#allocation9] sm:$0xf]
          %v386 = vld [vmem:[#allocation9 + $0x4] sm:$0xf]
          %v387 = vld [vmem:[#allocation9 + $0x8] sm:$0xf]
          %v388 = vld [vmem:[#allocation9 + $0xc] sm:$0xf]
          %v389 = vld [vmem:[%s5] sm:$0x1]
          %v391 = vlaneseq
          %v392 = vshrl.u32 %v391, 7
          %v393 = vsub.s32 0, %v392
          %v394 = vrot.slane %v389, %v393
          %v400 = vunpack.c.l.b16 %v385
          %v401 = vunpack.c.l.b16 %v386
          %v402 = vunpack.c.l.b16 %v387
          %v403 = vunpack.c.l.b16 %v388
          %v404 = vpack.c.b16 %v401, %v400
          %v405 = vpack.c.b16 %v403, %v402
          %vm408 = vcmask 261120
          %v410 = vsel %vm408, %v384, 0
          %412 = vmatprep.subr.bf16.mxu0 0
          %413 = vmatpush1.bf16.msra.mxu0 %v404
          %414 = vmatprep.subr.bf16.mxu0 0
          %415 = vmatpush1.bf16.msra.mxu0 %v405
          %416 = vmatprep.subr.bf16.mxu0 0
          %417 = vmatpush1.bf16.msra.mxu0 0
          %418 = vmatprep.subr.bf16.mxu0 0
          %419 = vmatpush1.bf16.msra.mxu0 0
          %420 = vmatprep.subr.bf16.mxu0 0
          %421 = vmatpush1.bf16.msra.mxu0 0
          %422 = vmatprep.subr.bf16.mxu0 0
          %423 = vmatpush1.bf16.msra.mxu0 0
          %424 = vmatprep.subr.bf16.mxu0 0
          %425 = vmatpush1.bf16.msra.mxu0 0
          %426 = vmatprep.subr.bf16.mxu0 0
          %427 = vmatpush1.bf16.msra.mxu0 0
          %428 = vmatprep.subr.bf16.mxu0 0
          %429 = vmatpush1.bf16.msra.mxu0 0
          %430 = vmatprep.subr.bf16.mxu0 0
          %431 = vmatpush1.bf16.msra.mxu0 0
          %432 = vmatprep.subr.bf16.mxu0 0
          %433 = vmatpush1.bf16.msra.mxu0 0
          %434 = vmatprep.subr.bf16.mxu0 0
          %435 = vmatpush1.bf16.msra.mxu0 0
          %436 = vmatprep.subr.bf16.mxu0 0
          %437 = vmatpush1.bf16.msra.mxu0 0
          %438 = vmatprep.subr.bf16.mxu0 0
          %439 = vmatpush1.bf16.msra.mxu0 0
          %440 = vmatprep.subr.bf16.mxu0 0
          %441 = vmatpush1.bf16.msra.mxu0 0
          %442 = vmatprep.subr.bf16.mxu0 0
          %443 = vmatpush1.bf16.msra.mxu0 0
          %444 = vmatprep.mubr.bf16.mxu0 0
          %445 = vmatmul.mubr.bf16.gmra.mrb[0].mxu0 %v410
          %v446 = vpop.f32.mrb[0].mxu0
          %v447 = vadd.f32 %v394, %v446
          %v448 = vpop.f32.mrb[0].mxu0
          %v449 = vpop.f32.mrb[0].mxu0
          %v450 = vpop.f32.mrb[0].mxu0
          %451 = vdwg.mxu0
          %v452 = vld [vmem:[%s6] sm:$0xf]
          %v453 = vld [vmem:[%s6 + $0x4] sm:$0xf]
          %v454 = vld [vmem:[%s6 + $0x8] sm:$0xf]
          %v455 = vld [vmem:[%s6 + $0xc] sm:$0xf]
          %v456 = vld [vmem:[%s7] sm:$0x1]
          %v458 = vlaneseq
          %v459 = vshrl.u32 %v458, 7
          %v460 = vsub.s32 0, %v459
          %v461 = vrot.slane %v456, %v460
          %v467 = vunpack.c.l.b16 %v452
          %v468 = vunpack.c.l.b16 %v453
          %v469 = vunpack.c.l.b16 %v454
          %v470 = vunpack.c.l.b16 %v455
          %v471 = vpack.c.b16 %v468, %v467
          %v472 = vpack.c.b16 %v470, %v469
          %475 = vmatprep.subr.bf16.mxu0 0
          %476 = vmatpush1.bf16.msra.mxu0 %v471
          %477 = vmatprep.subr.bf16.mxu0 0
          %478 = vmatpush1.bf16.msra.mxu0 %v472
          %479 = vmatprep.subr.bf16.mxu0 0
          %480 = vmatpush1.bf16.msra.mxu0 0
          %481 = vmatprep.subr.bf16.mxu0 0
          %482 = vmatpush1.bf16.msra.mxu0 0
          %483 = vmatprep.subr.bf16.mxu0 0
          %484 = vmatpush1.bf16.msra.mxu0 0
          %485 = vmatprep.subr.bf16.mxu0 0
          %486 = vmatpush1.bf16.msra.mxu0 0
          %487 = vmatprep.subr.bf16.mxu0 0
          %488 = vmatpush1.bf16.msra.mxu0 0
          %489 = vmatprep.subr.bf16.mxu0 0
          %490 = vmatpush1.bf16.msra.mxu0 0
          %491 = vmatprep.subr.bf16.mxu0 0
          %492 = vmatpush1.bf16.msra.mxu0 0
          %493 = vmatprep.subr.bf16.mxu0 0
          %494 = vmatpush1.bf16.msra.mxu0 0
          %495 = vmatprep.subr.bf16.mxu0 0
          %496 = vmatpush1.bf16.msra.mxu0 0
          %497 = vmatprep.subr.bf16.mxu0 0
          %498 = vmatpush1.bf16.msra.mxu0 0
          %499 = vmatprep.subr.bf16.mxu0 0
          %500 = vmatpush1.bf16.msra.mxu0 0
          %501 = vmatprep.subr.bf16.mxu0 0
          %502 = vmatpush1.bf16.msra.mxu0 0
          %503 = vmatprep.subr.bf16.mxu0 0
          %504 = vmatpush1.bf16.msra.mxu0 0
          %505 = vmatprep.subr.bf16.mxu0 0
          %506 = vmatpush1.bf16.msra.mxu0 0
          %507 = vmatprep.mubr.bf16.mxu0 0
          %508 = vmatmul.mubr.bf16.gmra.mrb[0].mxu0 %v410
          %v509 = vpop.f32.mrb[0].mxu0
          %v510 = vadd.f32 %v461, %v509
          %v511 = vpop.f32.mrb[0].mxu0
          %v512 = vpop.f32.mrb[0].mxu0
          %v513 = vpop.f32.mrb[0].mxu0
          %514 = vdwg.mxu0
          %v515 = vpack.c.bf16 %v447, %v447
          %vm516 = vcmask 257024
          %517 = vst.msk [vmem:[#allocation2] sm:$0xf] %vm516, %v515
          %v518 = vpack.c.bf16 %v510, %v510
          %519 = vst.msk [vmem:[#allocation3] sm:$0xf] %vm516, %v518
        $region68: #{tpu_custom_call.1} parent=51 // pred_fallthru
          _
        %s520 = smul.u32 %s31, 8
        %s521 = scalar_lea.vmem %s331, %s520 [#allocation4]
        %v522 = vld [vmem:[%s521] sm:$0xff]
        %v523 = vpack.c.bf16 %v522, %v522
        %v524 = vld [vmem:[#allocation7] sm:$0xf]
        %v525 = vld [vmem:[#allocation7 + $0x4] sm:$0xf]
        %v526 = vld [vmem:[#allocation7 + $0x8] sm:$0xf]
        %v527 = vld [vmem:[#allocation7 + $0xc] sm:$0xf]
        %v528 = vld [vmem:[%s3] sm:$0x1]
        %v530 = vlaneseq
        %v531 = vshrl.u32 %v530, 7
        %v532 = vsub.s32 0, %v531
        %v533 = vrot.slane %v528, %v532
        %v539 = vunpack.c.l.b16 %v524
        %v540 = vunpack.c.l.b16 %v525
        %v541 = vunpack.c.l.b16 %v526
        %v542 = vunpack.c.l.b16 %v527
        %v543 = vpack.c.b16 %v540, %v539
        %v544 = vpack.c.b16 %v542, %v541
        %vm547 = vcmask 261120
        %v549 = vsel %vm547, %v523, 0
        %551 = vmatprep.subr.bf16.mxu0 0
        %552 = vmatpush1.bf16.msra.mxu0 %v543
        %553 = vmatprep.subr.bf16.mxu0 0
        %554 = vmatpush1.bf16.msra.mxu0 %v544
        %555 = vmatprep.subr.bf16.mxu0 0
        %556 = vmatpush1.bf16.msra.mxu0 0
        %557 = vmatprep.subr.bf16.mxu0 0
        %558 = vmatpush1.bf16.msra.mxu0 0
        %559 = vmatprep.subr.bf16.mxu0 0
        %560 = vmatpush1.bf16.msra.mxu0 0
        %561 = vmatprep.subr.bf16.mxu0 0
        %562 = vmatpush1.bf16.msra.mxu0 0
        %563 = vmatprep.subr.bf16.mxu0 0
        %564 = vmatpush1.bf16.msra.mxu0 0
        %565 = vmatprep.subr.bf16.mxu0 0
        %566 = vmatpush1.bf16.msra.mxu0 0
        %567 = vmatprep.subr.bf16.mxu0 0
        %568 = vmatpush1.bf16.msra.mxu0 0
        %569 = vmatprep.subr.bf16.mxu0 0
        %570 = vmatpush1.bf16.msra.mxu0 0
        %571 = vmatprep.subr.bf16.mxu0 0
        %572 = vmatpush1.bf16.msra.mxu0 0
        %573 = vmatprep.subr.bf16.mxu0 0
        %574 = vmatpush1.bf16.msra.mxu0 0
        %575 = vmatprep.subr.bf16.mxu0 0
        %576 = vmatpush1.bf16.msra.mxu0 0
        %577 = vmatprep.subr.bf16.mxu0 0
        %578 = vmatpush1.bf16.msra.mxu0 0
        %579 = vmatprep.subr.bf16.mxu0 0
        %580 = vmatpush1.bf16.msra.mxu0 0
        %581 = vmatprep.subr.bf16.mxu0 0
        %582 = vmatpush1.bf16.msra.mxu0 0
        %583 = vmatprep.mubr.bf16.mxu0 0
        %584 = vmatmul.mubr.bf16.gmra.mrb[0].mxu0 %v549
        %v585 = vpop.f32.mrb[0].mxu0
        %v586 = vadd.f32 %v533, %v585
        %v587 = vpop.f32.mrb[0].mxu0
        %v588 = vpop.f32.mrb[0].mxu0
        %v589 = vpop.f32.mrb[0].mxu0
        %590 = vdwg.mxu0
        %v591 = vmul.f32 %v586, 0.35355338
        %593 = vrot.lane.b32.xlu0 %v591, 120
        %v594 = vpop.permute.xlu0 %593
        %596 = vrot.lane.b32.xlu0 %v591, 112
        %v597 = vpop.permute.xlu0 %596
        %599 = vrot.lane.b32.xlu0 %v591, 104
        %v600 = vpop.permute.xlu0 %599
        %v602 = vcombine.low %v591, %v597
        %v603 = vcombine.high %v591, %v597
        %v605 = vunpack.c.l.s4 1983009808
        %v606 = vunpack.c.0.s8 %v605
        %v607 = vlaneseq
        %v608 = vshrl.u32 %v607, 7
        %v609 = vsub.s32 %v606, %v608
        %v610 = vrot.slane %v602, %v609
        %v612 = vunpack.c.l.s4 1983009808
        %v613 = vunpack.c.0.s8 %v612
        %v614 = vlaneseq
        %v615 = vshrl.u32 %v614, 7
        %v616 = vsub.s32 %v613, %v615
        %v617 = vrot.slane %v603, %v616
        %v618 = vcombine.low %v594, %v600
        %v619 = vcombine.high %v594, %v600
        %v621 = vunpack.c.l.s4 1983009808
        %v622 = vunpack.c.0.s8 %v621
        %v623 = vlaneseq
        %v624 = vshrl.u32 %v623, 7
        %v625 = vsub.s32 %v622, %v624
        %v626 = vrot.slane %v618, %v625
        %v628 = vunpack.c.l.s4 1983009808
        %v629 = vunpack.c.0.s8 %v628
        %v630 = vlaneseq
        %v631 = vshrl.u32 %v630, 7
        %v632 = vsub.s32 %v629, %v631
        %v633 = vrot.slane %v619, %v632
        %v634 = vcombine.low %v610, %v626
        %v635 = vcombine.high %v610, %v626
        %v637 = vunpack.c.l.s4 1934713408
        %v638 = vunpack.c.0.s8 %v637
        %v639 = vlaneseq
        %v640 = vshrl.u32 %v639, 7
        %v641 = vsub.s32 %v638, %v640
        %v642 = vrot.slane %v634, %v641
        %v644 = vunpack.c.l.s4 1934713408
        %v645 = vunpack.c.0.s8 %v644
        %v646 = vlaneseq
        %v647 = vshrl.u32 %v646, 7
        %v648 = vsub.s32 %v645, %v647
        %v649 = vrot.slane %v635, %v648
        %v650 = vcombine.low %v617, %v633
        %v651 = vcombine.high %v617, %v633
        %v653 = vunpack.c.l.s4 1934713408
        %v654 = vunpack.c.0.s8 %v653
        %v655 = vlaneseq
        %v656 = vshrl.u32 %v655, 7
        %v657 = vsub.s32 %v654, %v656
        %v658 = vrot.slane %v650, %v657
        %v660 = vunpack.c.l.s4 1934713408
        %v661 = vunpack.c.0.s8 %v660
        %v662 = vlaneseq
        %v663 = vshrl.u32 %v662, 7
        %v664 = vsub.s32 %v661, %v663
        %v665 = vrot.slane %v651, %v664
        %v666 = vcombine.high %v642, 0.0
        %v667 = vcombine.high %v649, 0.0
        %v668 = vcombine.high %v658, 0.0
        %v669 = vcombine.high %v665, 0.0
        %v670 = vpack.c.bf16 %v642, %v642
        %v671 = vpack.c.bf16 %v666, %v666
        %v672 = vpack.c.bf16 %v649, %v649
        %v673 = vpack.c.bf16 %v667, %v667
        %v674 = vpack.c.bf16 %v658, %v658
        %v675 = vpack.c.bf16 %v668, %v668
        %v676 = vpack.c.bf16 %v665, %v665
        %v677 = vpack.c.bf16 %v669, %v669
        %v678 = vld [vmem:[#allocation2] sm:$0xf]
        %680 = vrot.lane.b32.xlu0 %v678, 120
        %v681 = vpop.permute.xlu0 %680
        %683 = vrot.lane.b32.xlu0 %v678, 112
        %v684 = vpop.permute.xlu0 %683
        %686 = vrot.lane.b32.xlu0 %v678, 104
        %v687 = vpop.permute.xlu0 %686
        %v689 = vld [vmem:[#allocation3] sm:$0xf]
        %691 = vrot.lane.b32.xlu0 %v689, 120
        %v692 = vpop.permute.xlu0 %691
        %693 = vrot.lane.b32.xlu0 %v689, 112
        %v694 = vpop.permute.xlu0 %693
        %695 = vrot.lane.b32.xlu0 %v689, 104
        %v696 = vpop.permute.xlu0 %695
        %v697 = vld [vmem:[%s377] sm:$0x1]
        %v699 = vlaneseq
        %v700 = vshrl.u32 %v699, 7
        %v701 = vsub.s32 0, %v700
        %v702 = vrot.slane %v697, %v701
        %v704 = vcombine.low %v670, %v674
        %v706 = vunpack.c.l.s4 1983009808
        %v707 = vunpack.c.0.s8 %v706
        %v708 = vlaneseq
        %v709 = vshrl.u32 %v708, 7
        %v710 = vsub.s32 %v707, %v709
        %v711 = vrot.slane %v704, %v710
        %v712 = vcombine.low %v672, %v676
        %v714 = vunpack.c.l.s4 1983009808
        %v715 = vunpack.c.0.s8 %v714
        %v716 = vlaneseq
        %v717 = vshrl.u32 %v716, 7
        %v718 = vsub.s32 %v715, %v717
        %v719 = vrot.slane %v712, %v718
        %v720 = vcombine.low %v711, %v719
        %v722 = vunpack.c.l.s4 1934713408
        %v723 = vunpack.c.0.s8 %v722
        %v724 = vlaneseq
        %v725 = vshrl.u32 %v724, 7
        %v726 = vsub.s32 %v723, %v725
        %v727 = vrot.slane %v720, %v726
        %v728 = vcombine.high %v727, 0
        %v729 = vcombine.low %v671, %v675
        %v731 = vunpack.c.l.s4 1983009808
        %v732 = vunpack.c.0.s8 %v731
        %v733 = vlaneseq
        %v734 = vshrl.u32 %v733, 7
        %v735 = vsub.s32 %v732, %v734
        %v736 = vrot.slane %v729, %v735
        %v737 = vcombine.low %v673, %v677
        %v739 = vunpack.c.l.s4 1983009808
        %v740 = vunpack.c.0.s8 %v739
        %v741 = vlaneseq
        %v742 = vshrl.u32 %v741, 7
        %v743 = vsub.s32 %v740, %v742
        %v744 = vrot.slane %v737, %v743
        %v745 = vcombine.low %v736, %v744
        %v747 = vunpack.c.l.s4 1934713408
        %v748 = vunpack.c.0.s8 %v747
        %v749 = vlaneseq
        %v750 = vshrl.u32 %v749, 7
        %v751 = vsub.s32 %v748, %v750
        %v752 = vrot.slane %v745, %v751
        %v753 = vcombine.high %v752, 0
        %v756 = vpack.i.b16 %v752, %v727
        %v757 = vshrl.u32 %v727, 16
        %v758 = vshrl.u32 %v752, 16
        %v759 = vpack.i.b16 %v758, %v757
        %v762 = vpack.i.b16 %v753, %v728
        %v763 = vshrl.u32 %v728, 16
        %v764 = vshrl.u32 %v753, 16
        %v765 = vpack.i.b16 %v764, %v763
        %766 = vxpose.xlu0.c.b16.start [1/8] %v678, 128
        %767 = vxpose.xlu0.c.b16.cont [2/8] 0, 128
        %768 = vxpose.xlu0.c.b16.cont [3/8] 0, 128
        %769 = vxpose.xlu0.c.b16.cont [4/8] 0, 128
        %770 = vxpose.xlu0.c.b16.cont [5/8] 0, 128
        %771 = vxpose.xlu0.c.b16.cont [6/8] 0, 128
        %772 = vxpose.xlu0.c.b16.cont [7/8] 0, 128
        %773 = vxpose.xlu0.c.b16.end [8/8] 0, 128
        %v774 = vpop.trf.xlu0
        %v775 = vpop.trf.xlu0
        %v776 = vpop.trf.xlu0
        %v777 = vpop.trf.xlu0
        %v778 = vpop.trf.xlu0
        %v779 = vpop.trf.xlu0
        %v780 = vpop.trf.xlu0
        %v781 = vpop.trf.xlu0
        %782 = vxpose.xlu0.c.b16.start [1/8] %v681, 128
        %783 = vxpose.xlu0.c.b16.cont [2/8] 0, 128
        %784 = vxpose.xlu0.c.b16.cont [3/8] 0, 128
        %785 = vxpose.xlu0.c.b16.cont [4/8] 0, 128
        %786 = vxpose.xlu0.c.b16.cont [5/8] 0, 128
        %787 = vxpose.xlu0.c.b16.cont [6/8] 0, 128
        %788 = vxpose.xlu0.c.b16.cont [7/8] 0, 128
        %789 = vxpose.xlu0.c.b16.end [8/8] 0, 128
        %v790 = vpop.trf.xlu0
        %v791 = vpop.trf.xlu0
        %v792 = vpop.trf.xlu0
        %v793 = vpop.trf.xlu0
        %v794 = vpop.trf.xlu0
        %v795 = vpop.trf.xlu0
        %v796 = vpop.trf.xlu0
        %v797 = vpop.trf.xlu0
        %798 = vxpose.xlu0.c.b16.start [1/8] %v684, 128
        %799 = vxpose.xlu0.c.b16.cont [2/8] 0, 128
        %800 = vxpose.xlu0.c.b16.cont [3/8] 0, 128
        %801 = vxpose.xlu0.c.b16.cont [4/8] 0, 128
        %802 = vxpose.xlu0.c.b16.cont [5/8] 0, 128
        %803 = vxpose.xlu0.c.b16.cont [6/8] 0, 128
        %804 = vxpose.xlu0.c.b16.cont [7/8] 0, 128
        %805 = vxpose.xlu0.c.b16.end [8/8] 0, 128
        %v806 = vpop.trf.xlu0
        %v807 = vpop.trf.xlu0
        %v808 = vpop.trf.xlu0
        %v809 = vpop.trf.xlu0
        %v810 = vpop.trf.xlu0
        %v811 = vpop.trf.xlu0
        %v812 = vpop.trf.xlu0
        %v813 = vpop.trf.xlu0
        %814 = vxpose.xlu0.c.b16.start [1/8] %v687, 128
        %815 = vxpose.xlu0.c.b16.cont [2/8] 0, 128
        %816 = vxpose.xlu0.c.b16.cont [3/8] 0, 128
        %817 = vxpose.xlu0.c.b16.cont [4/8] 0, 128
        %818 = vxpose.xlu0.c.b16.cont [5/8] 0, 128
        %819 = vxpose.xlu0.c.b16.cont [6/8] 0, 128
        %820 = vxpose.xlu0.c.b16.cont [7/8] 0, 128
        %821 = vxpose.xlu0.c.b16.end [8/8] 0, 128
        %v822 = vpop.trf.xlu0
        %v823 = vpop.trf.xlu0
        %v824 = vpop.trf.xlu0
        %v825 = vpop.trf.xlu0
        %v826 = vpop.trf.xlu0
        %v827 = vpop.trf.xlu0
        %v828 = vpop.trf.xlu0
        %v829 = vpop.trf.xlu0
        %vm830 = vcmask 64512
        %v832 = vsel %vm830, %v756, 0
        %vm834 = vcmask 1043456
        %v836 = vsel %vm834, %v774, 0
        %838 = vmatprep.subr.bf16.mxu0 0
        %839 = vmatpush1.bf16.msra.mxu0 %v836
        %840 = vmatprep.subr.bf16.mxu0 0
        %841 = vmatpush1.bf16.msra.mxu0 0
        %842 = vmatprep.subr.bf16.mxu0 0
        %843 = vmatpush1.bf16.msra.mxu0 0
        %844 = vmatprep.subr.bf16.mxu0 0
        %845 = vmatpush1.bf16.msra.mxu0 0
        %846 = vmatprep.subr.bf16.mxu0 0
        %847 = vmatpush1.bf16.msra.mxu0 0
        %848 = vmatprep.subr.bf16.mxu0 0
        %849 = vmatpush1.bf16.msra.mxu0 0
        %850 = vmatprep.subr.bf16.mxu0 0
        %851 = vmatpush1.bf16.msra.mxu0 0
        %852 = vmatprep.subr.bf16.mxu0 0
        %853 = vmatpush1.bf16.msra.mxu0 0
        %854 = vmatprep.subr.bf16.mxu0 0
        %855 = vmatpush1.bf16.msra.mxu0 0
        %856 = vmatprep.subr.bf16.mxu0 0
        %857 = vmatpush1.bf16.msra.mxu0 0
        %858 = vmatprep.subr.bf16.mxu0 0
        %859 = vmatpush1.bf16.msra.mxu0 0
        %860 = vmatprep.subr.bf16.mxu0 0
        %861 = vmatpush1.bf16.msra.mxu0 0
        %862 = vmatprep.subr.bf16.mxu0 0
        %863 = vmatpush1.bf16.msra.mxu0 0
        %864 = vmatprep.subr.bf16.mxu0 0
        %865 = vmatpush1.bf16.msra.mxu0 0
        %866 = vmatprep.subr.bf16.mxu0 0
        %867 = vmatpush1.bf16.msra.mxu0 0
        %868 = vmatprep.subr.bf16.mxu0 0
        %869 = vmatpush1.bf16.msra.mxu0 0
        %870 = vmatprep.mubr.bf16.mxu0 0
        %871 = vmatmul.mubr.bf16.gmra.mrb[0].mxu0 %v832
        %v872 = vpop.f32.mrb[0].mxu0
        %v873 = vadd.f32 %v702, %v872
        %v874 = vpop.f32.mrb[0].mxu0
        %v875 = vpop.f32.mrb[0].mxu0
        %v876 = vpop.f32.mrb[0].mxu0
        %877 = vdwg.mxu0
        %v879 = vsel %vm830, %v759, 0
        %v882 = vsel %vm834, %v790, 0
        %884 = vmatprep.subr.bf16.mxu0 0
        %885 = vmatpush1.bf16.msra.mxu0 %v882
        %886 = vmatprep.subr.bf16.mxu0 0
        %887 = vmatpush1.bf16.msra.mxu0 0
        %888 = vmatprep.subr.bf16.mxu0 0
        %889 = vmatpush1.bf16.msra.mxu0 0
        %890 = vmatprep.subr.bf16.mxu0 0
        %891 = vmatpush1.bf16.msra.mxu0 0
        %892 = vmatprep.subr.bf16.mxu0 0
        %893 = vmatpush1.bf16.msra.mxu0 0
        %894 = vmatprep.subr.bf16.mxu0 0
        %895 = vmatpush1.bf16.msra.mxu0 0
        %896 = vmatprep.subr.bf16.mxu0 0
        %897 = vmatpush1.bf16.msra.mxu0 0
        %898 = vmatprep.subr.bf16.mxu0 0
        %899 = vmatpush1.bf16.msra.mxu0 0
        %900 = vmatprep.subr.bf16.mxu0 0
        %901 = vmatpush1.bf16.msra.mxu0 0
        %902 = vmatprep.subr.bf16.mxu0 0
        %903 = vmatpush1.bf16.msra.mxu0 0
        %904 = vmatprep.subr.bf16.mxu0 0
        %905 = vmatpush1.bf16.msra.mxu0 0
        %906 = vmatprep.subr.bf16.mxu0 0
        %907 = vmatpush1.bf16.msra.mxu0 0
        %908 = vmatprep.subr.bf16.mxu0 0
        %909 = vmatpush1.bf16.msra.mxu0 0
        %910 = vmatprep.subr.bf16.mxu0 0
        %911 = vmatpush1.bf16.msra.mxu0 0
        %912 = vmatprep.subr.bf16.mxu0 0
        %913 = vmatpush1.bf16.msra.mxu0 0
        %914 = vmatprep.subr.bf16.mxu0 0
        %915 = vmatpush1.bf16.msra.mxu0 0
        %916 = vmatprep.mubr.bf16.mxu0 0
        %917 = vmatmul.mubr.bf16.gmra.mrb[0].mxu0 %v879
        %v918 = vpop.f32.mrb[0].mxu0
        %v919 = vadd.f32 %v702, %v918
        %v920 = vpop.f32.mrb[0].mxu0
        %v921 = vpop.f32.mrb[0].mxu0
        %v922 = vpop.f32.mrb[0].mxu0
        %923 = vdwg.mxu0
        %v925 = vsel %vm830, %v762, 0
        %v928 = vsel %vm834, %v806, 0
        %930 = vmatprep.subr.bf16.mxu0 0
        %931 = vmatpush1.bf16.msra.mxu0 %v928
        %932 = vmatprep.subr.bf16.mxu0 0
        %933 = vmatpush1.bf16.msra.mxu0 0
        %934 = vmatprep.subr.bf16.mxu0 0
        %935 = vmatpush1.bf16.msra.mxu0 0
        %936 = vmatprep.subr.bf16.mxu0 0
        %937 = vmatpush1.bf16.msra.mxu0 0
        %938 = vmatprep.subr.bf16.mxu0 0
        %939 = vmatpush1.bf16.msra.mxu0 0
        %940 = vmatprep.subr.bf16.mxu0 0
        %941 = vmatpush1.bf16.msra.mxu0 0
        %942 = vmatprep.subr.bf16.mxu0 0
        %943 = vmatpush1.bf16.msra.mxu0 0
        %944 = vmatprep.subr.bf16.mxu0 0
        %945 = vmatpush1.bf16.msra.mxu0 0
        %946 = vmatprep.subr.bf16.mxu0 0
        %947 = vmatpush1.bf16.msra.mxu0 0
        %948 = vmatprep.subr.bf16.mxu0 0
        %949 = vmatpush1.bf16.msra.mxu0 0
        %950 = vmatprep.subr.bf16.mxu0 0
        %951 = vmatpush1.bf16.msra.mxu0 0
        %952 = vmatprep.subr.bf16.mxu0 0
        %953 = vmatpush1.bf16.msra.mxu0 0
        %954 = vmatprep.subr.bf16.mxu0 0
        %955 = vmatpush1.bf16.msra.mxu0 0
        %956 = vmatprep.subr.bf16.mxu0 0
        %957 = vmatpush1.bf16.msra.mxu0 0
        %958 = vmatprep.subr.bf16.mxu0 0
        %959 = vmatpush1.bf16.msra.mxu0 0
        %960 = vmatprep.subr.bf16.mxu0 0
        %961 = vmatpush1.bf16.msra.mxu0 0
        %962 = vmatprep.mubr.bf16.mxu0 0
        %963 = vmatmul.mubr.bf16.gmra.mrb[0].mxu0 %v925
        %v964 = vpop.f32.mrb[0].mxu0
        %v965 = vadd.f32 %v702, %v964
        %v966 = vpop.f32.mrb[0].mxu0
        %v967 = vpop.f32.mrb[0].mxu0
        %v968 = vpop.f32.mrb[0].mxu0
        %969 = vdwg.mxu0
        %v971 = vsel %vm830, %v765, 0
        %v974 = vsel %vm834, %v822, 0
        %976 = vmatprep.subr.bf16.mxu0 0
        %977 = vmatpush1.bf16.msra.mxu0 %v974
        %978 = vmatprep.subr.bf16.mxu0 0
        %979 = vmatpush1.bf16.msra.mxu0 0
        %980 = vmatprep.subr.bf16.mxu0 0
        %981 = vmatpush1.bf16.msra.mxu0 0
        %982 = vmatprep.subr.bf16.mxu0 0
        %983 = vmatpush1.bf16.msra.mxu0 0
        %984 = vmatprep.subr.bf16.mxu0 0
        %985 = vmatpush1.bf16.msra.mxu0 0
        %986 = vmatprep.subr.bf16.mxu0 0
        %987 = vmatpush1.bf16.msra.mxu0 0
        %988 = vmatprep.subr.bf16.mxu0 0
        %989 = vmatpush1.bf16.msra.mxu0 0
        %990 = vmatprep.subr.bf16.mxu0 0
        %991 = vmatpush1.bf16.msra.mxu0 0
        %992 = vmatprep.subr.bf16.mxu0 0
        %993 = vmatpush1.bf16.msra.mxu0 0
        %994 = vmatprep.subr.bf16.mxu0 0
        %995 = vmatpush1.bf16.msra.mxu0 0
        %996 = vmatprep.subr.bf16.mxu0 0
        %997 = vmatpush1.bf16.msra.mxu0 0
        %998 = vmatprep.subr.bf16.mxu0 0
        %999 = vmatpush1.bf16.msra.mxu0 0
        %1000 = vmatprep.subr.bf16.mxu0 0
        %1001 = vmatpush1.bf16.msra.mxu0 0
        %1002 = vmatprep.subr.bf16.mxu0 0
        %1003 = vmatpush1.bf16.msra.mxu0 0
        %1004 = vmatprep.subr.bf16.mxu0 0
        %1005 = vmatpush1.bf16.msra.mxu0 0
        %1006 = vmatprep.subr.bf16.mxu0 0
        %1007 = vmatpush1.bf16.msra.mxu0 0
        %1008 = vmatprep.mubr.bf16.mxu0 0
        %1009 = vmatmul.mubr.bf16.gmra.mrb[0].mxu0 %v971
        %v1010 = vpop.f32.mrb[0].mxu0
        %v1011 = vadd.f32 %v702, %v1010
        %v1012 = vpop.f32.mrb[0].mxu0
        %v1013 = vpop.f32.mrb[0].mxu0
        %v1014 = vpop.f32.mrb[0].mxu0
        %1015 = vdwg.mxu0
        %v1016 = vsel %vm830, %v873, -inf
        %1017 = vmax.xlane.f32.xlu0 %v1016
        %v1018 = vpop.xlane.xlu0 %1017
        %v1019 = vsel %vm830, %v919, -inf
        %1020 = vmax.xlane.f32.xlu0 %v1019
        %v1021 = vpop.xlane.xlu0 %1020
        %v1022 = vsel %vm830, %v965, -inf
        %1023 = vmax.xlane.f32.xlu0 %v1022
        %v1024 = vpop.xlane.xlu0 %1023
        %v1025 = vsel %vm830, %v1011, -inf
        %1026 = vmax.xlane.f32.xlu0 %v1025
        %v1027 = vpop.xlane.xlu0 %1026
        %v1028 = vsub.f32 -inf, %v1018
        %v1029 = vsub.f32 -inf, %v1021
        %v1030 = vsub.f32 -inf, %v1024
        %v1031 = vsub.f32 -inf, %v1027
        %v1032 = vmul.f32 %v1028, 1.442695
        %v1033 = vpow.pop %v1032
        %v1034 = vmul.f32 %v1029, 1.442695
        %v1035 = vpow.pop %v1034
        %v1036 = vmul.f32 %v1030, 1.442695
        %v1037 = vpow.pop %v1036
        %v1038 = vmul.f32 %v1031, 1.442695
        %v1039 = vpow.pop %v1038
        %v1040 = vsub.f32 %v873, %v1018
        %v1041 = vsub.f32 %v919, %v1021
        %v1042 = vsub.f32 %v965, %v1024
        %v1043 = vsub.f32 %v1011, %v1027
        %v1044 = vmul.f32 %v1040, 1.442695
        %v1045 = vpow.pop %v1044
        %v1046 = vmul.f32 %v1041, 1.442695
        %v1047 = vpow.pop %v1046
        %v1048 = vmul.f32 %v1042, 1.442695
        %v1049 = vpow.pop %v1048
        %v1050 = vmul.f32 %v1043, 1.442695
        %v1051 = vpow.pop %v1050
        %v1052 = vmul.f32 %v1033, 0.0
        %v1053 = vmul.f32 %v1035, 0.0
        %v1054 = vmul.f32 %v1037, 0.0
        %v1055 = vmul.f32 %v1039, 0.0
        %v1056 = vsel %vm830, %v1045, 0.0
        %1057 = vadd.xlane.f32.xlu0 %v1056
        %v1058 = vpop.xlane.xlu0 %1057
        %v1059 = vsel %vm830, %v1047, 0.0
        %1060 = vadd.xlane.f32.xlu0 %v1059
        %v1061 = vpop.xlane.xlu0 %1060
        %v1062 = vsel %vm830, %v1049, 0.0
        %1063 = vadd.xlane.f32.xlu0 %v1062
        %v1064 = vpop.xlane.xlu0 %1063
        %v1065 = vsel %vm830, %v1051, 0.0
        %1066 = vadd.xlane.f32.xlu0 %v1065
        %v1067 = vpop.xlane.xlu0 %1066
        %v1068 = vadd.f32 %v1052, %v1058
        %v1069 = vadd.f32 %v1053, %v1061
        %v1070 = vadd.f32 %v1054, %v1064
        %v1071 = vadd.f32 %v1055, %v1067
        %v1072 = vpack.c.bf16 %v1045, %v1045
        %v1073 = vpack.c.bf16 %v1047, %v1047
        %v1074 = vpack.c.bf16 %v1049, %v1049
        %v1075 = vpack.c.bf16 %v1051, %v1051
        %v1077 = vsel %vm830, %v1072, 0
        %v1080 = vsel %vm834, %v689, 0
        %1082 = vmatprep.subr.bf16.mxu0 0
        %1083 = vmatpush1.bf16.msra.mxu0 %v1080
        %1084 = vmatprep.subr.bf16.mxu0 0
        %1085 = vmatpush1.bf16.msra.mxu0 0
        %1086 = vmatprep.subr.bf16.mxu0 0
        %1087 = vmatpush1.bf16.msra.mxu0 0
        %1088 = vmatprep.subr.bf16.mxu0 0
        %1089 = vmatpush1.bf16.msra.mxu0 0
        %1090 = vmatprep.subr.bf16.mxu0 0
        %1091 = vmatpush1.bf16.msra.mxu0 0
        %1092 = vmatprep.subr.bf16.mxu0 0
        %1093 = vmatpush1.bf16.msra.mxu0 0
        %1094 = vmatprep.subr.bf16.mxu0 0
        %1095 = vmatpush1.bf16.msra.mxu0 0
        %1096 = vmatprep.subr.bf16.mxu0 0
        %1097 = vmatpush1.bf16.msra.mxu0 0
        %1098 = vmatprep.subr.bf16.mxu0 0
        %1099 = vmatpush1.bf16.msra.mxu0 0
        %1100 = vmatprep.subr.bf16.mxu0 0
        %1101 = vmatpush1.bf16.msra.mxu0 0
        %1102 = vmatprep.subr.bf16.mxu0 0
        %1103 = vmatpush1.bf16.msra.mxu0 0
        %1104 = vmatprep.subr.bf16.mxu0 0
        %1105 = vmatpush1.bf16.msra.mxu0 0
        %1106 = vmatprep.subr.bf16.mxu0 0
        %1107 = vmatpush1.bf16.msra.mxu0 0
        %1108 = vmatprep.subr.bf16.mxu0 0
        %1109 = vmatpush1.bf16.msra.mxu0 0
        %1110 = vmatprep.subr.bf16.mxu0 0
        %1111 = vmatpush1.bf16.msra.mxu0 0
        %1112 = vmatprep.subr.bf16.mxu0 0
        %1113 = vmatpush1.bf16.msra.mxu0 0
        %1114 = vmatprep.mubr.bf16.mxu0 0
        %1115 = vmatmul.mubr.bf16.gmra.mrb[0].mxu0 %v1077
        %v1116 = vpop.f32.mrb[0].mxu0
        %v1117 = vadd.f32 0.0, %v1116
        %v1118 = vpop.f32.mrb[0].mxu0
        %v1119 = vpop.f32.mrb[0].mxu0
        %v1120 = vpop.f32.mrb[0].mxu0
        %1121 = vdwg.mxu0
        %v1123 = vsel %vm830, %v1073, 0
        %v1126 = vsel %vm834, %v692, 0
        %1128 = vmatprep.subr.bf16.mxu0 0
        %1129 = vmatpush1.bf16.msra.mxu0 %v1126
        %1130 = vmatprep.subr.bf16.mxu0 0
        %1131 = vmatpush1.bf16.msra.mxu0 0
        %1132 = vmatprep.subr.bf16.mxu0 0
        %1133 = vmatpush1.bf16.msra.mxu0 0
        %1134 = vmatprep.subr.bf16.mxu0 0
        %1135 = vmatpush1.bf16.msra.mxu0 0
        %1136 = vmatprep.subr.bf16.mxu0 0
        %1137 = vmatpush1.bf16.msra.mxu0 0
        %1138 = vmatprep.subr.bf16.mxu0 0
        %1139 = vmatpush1.bf16.msra.mxu0 0
        %1140 = vmatprep.subr.bf16.mxu0 0
        %1141 = vmatpush1.bf16.msra.mxu0 0
        %1142 = vmatprep.subr.bf16.mxu0 0
        %1143 = vmatpush1.bf16.msra.mxu0 0
        %1144 = vmatprep.subr.bf16.mxu0 0
        %1145 = vmatpush1.bf16.msra.mxu0 0
        %1146 = vmatprep.subr.bf16.mxu0 0
        %1147 = vmatpush1.bf16.msra.mxu0 0
        %1148 = vmatprep.subr.bf16.mxu0 0
        %1149 = vmatpush1.bf16.msra.mxu0 0
        %1150 = vmatprep.subr.bf16.mxu0 0
        %1151 = vmatpush1.bf16.msra.mxu0 0
        %1152 = vmatprep.subr.bf16.mxu0 0
        %1153 = vmatpush1.bf16.msra.mxu0 0
        %1154 = vmatprep.subr.bf16.mxu0 0
        %1155 = vmatpush1.bf16.msra.mxu0 0
        %1156 = vmatprep.subr.bf16.mxu0 0
        %1157 = vmatpush1.bf16.msra.mxu0 0
        %1158 = vmatprep.subr.bf16.mxu0 0
        %1159 = vmatpush1.bf16.msra.mxu0 0
        %1160 = vmatprep.mubr.bf16.mxu0 0
        %1161 = vmatmul.mubr.bf16.gmra.mrb[0].mxu0 %v1123
        %v1162 = vpop.f32.mrb[0].mxu0
        %v1163 = vadd.f32 0.0, %v1162
        %v1164 = vpop.f32.mrb[0].mxu0
        %v1165 = vpop.f32.mrb[0].mxu0
        %v1166 = vpop.f32.mrb[0].mxu0
        %1167 = vdwg.mxu0
        %v1169 = vsel %vm830, %v1074, 0
        %v1172 = vsel %vm834, %v694, 0
        %1174 = vmatprep.subr.bf16.mxu0 0
        %1175 = vmatpush1.bf16.msra.mxu0 %v1172
        %1176 = vmatprep.subr.bf16.mxu0 0
        %1177 = vmatpush1.bf16.msra.mxu0 0
        %1178 = vmatprep.subr.bf16.mxu0 0
        %1179 = vmatpush1.bf16.msra.mxu0 0
        %1180 = vmatprep.subr.bf16.mxu0 0
        %1181 = vmatpush1.bf16.msra.mxu0 0
        %1182 = vmatprep.subr.bf16.mxu0 0
        %1183 = vmatpush1.bf16.msra.mxu0 0
        %1184 = vmatprep.subr.bf16.mxu0 0
        %1185 = vmatpush1.bf16.msra.mxu0 0
        %1186 = vmatprep.subr.bf16.mxu0 0
        %1187 = vmatpush1.bf16.msra.mxu0 0
        %1188 = vmatprep.subr.bf16.mxu0 0
        %1189 = vmatpush1.bf16.msra.mxu0 0
        %1190 = vmatprep.subr.bf16.mxu0 0
        %1191 = vmatpush1.bf16.msra.mxu0 0
        %1192 = vmatprep.subr.bf16.mxu0 0
        %1193 = vmatpush1.bf16.msra.mxu0 0
        %1194 = vmatprep.subr.bf16.mxu0 0
        %1195 = vmatpush1.bf16.msra.mxu0 0
        %1196 = vmatprep.subr.bf16.mxu0 0
        %1197 = vmatpush1.bf16.msra.mxu0 0
        %1198 = vmatprep.subr.bf16.mxu0 0
        %1199 = vmatpush1.bf16.msra.mxu0 0
        %1200 = vmatprep.subr.bf16.mxu0 0
        %1201 = vmatpush1.bf16.msra.mxu0 0
        %1202 = vmatprep.subr.bf16.mxu0 0
        %1203 = vmatpush1.bf16.msra.mxu0 0
        %1204 = vmatprep.subr.bf16.mxu0 0
        %1205 = vmatpush1.bf16.msra.mxu0 0
        %1206 = vmatprep.mubr.bf16.mxu0 0
        %1207 = vmatmul.mubr.bf16.gmra.mrb[0].mxu0 %v1169
        %v1208 = vpop.f32.mrb[0].mxu0
        %v1209 = vadd.f32 0.0, %v1208
        %v1210 = vpop.f32.mrb[0].mxu0
        %v1211 = vpop.f32.mrb[0].mxu0
        %v1212 = vpop.f32.mrb[0].mxu0
        %1213 = vdwg.mxu0
        %v1215 = vsel %vm830, %v1075, 0
        %v1218 = vsel %vm834, %v696, 0
        %1220 = vmatprep.subr.bf16.mxu0 0
        %1221 = vmatpush1.bf16.msra.mxu0 %v1218
        %1222 = vmatprep.subr.bf16.mxu0 0
        %1223 = vmatpush1.bf16.msra.mxu0 0
        %1224 = vmatprep.subr.bf16.mxu0 0
        %1225 = vmatpush1.bf16.msra.mxu0 0
        %1226 = vmatprep.subr.bf16.mxu0 0
        %1227 = vmatpush1.bf16.msra.mxu0 0
        %1228 = vmatprep.subr.bf16.mxu0 0
        %1229 = vmatpush1.bf16.msra.mxu0 0
        %1230 = vmatprep.subr.bf16.mxu0 0
        %1231 = vmatpush1.bf16.msra.mxu0 0
        %1232 = vmatprep.subr.bf16.mxu0 0
        %1233 = vmatpush1.bf16.msra.mxu0 0
        %1234 = vmatprep.subr.bf16.mxu0 0
        %1235 = vmatpush1.bf16.msra.mxu0 0
        %1236 = vmatprep.subr.bf16.mxu0 0
        %1237 = vmatpush1.bf16.msra.mxu0 0
        %1238 = vmatprep.subr.bf16.mxu0 0
        %1239 = vmatpush1.bf16.msra.mxu0 0
        %1240 = vmatprep.subr.bf16.mxu0 0
        %1241 = vmatpush1.bf16.msra.mxu0 0
        %1242 = vmatprep.subr.bf16.mxu0 0
        %1243 = vmatpush1.bf16.msra.mxu0 0
        %1244 = vmatprep.subr.bf16.mxu0 0
        %1245 = vmatpush1.bf16.msra.mxu0 0
        %1246 = vmatprep.subr.bf16.mxu0 0
        %1247 = vmatpush1.bf16.msra.mxu0 0
        %1248 = vmatprep.subr.bf16.mxu0 0
        %1249 = vmatpush1.bf16.msra.mxu0 0
        %1250 = vmatprep.subr.bf16.mxu0 0
        %1251 = vmatpush1.bf16.msra.mxu0 0
        %1252 = vmatprep.mubr.bf16.mxu0 0
        %1253 = vmatmul.mubr.bf16.gmra.mrb[0].mxu0 %v1215
        %v1254 = vpop.f32.mrb[0].mxu0
        %v1255 = vadd.f32 0.0, %v1254
        %v1256 = vpop.f32.mrb[0].mxu0
        %v1257 = vpop.f32.mrb[0].mxu0
        %v1258 = vpop.f32.mrb[0].mxu0
        %1259 = vdwg.mxu0
        %v1260 = vadd.f32 %v1052, %v1117
        %v1261 = vadd.f32 %v1053, %v1163
        %v1262 = vadd.f32 %v1054, %v1209
        %v1263 = vadd.f32 %v1055, %v1255
        %v1264 = vrcp.pop %v1068
        %v1265 = vrcp.pop %v1069
        %v1266 = vrcp.pop %v1070
        %v1267 = vrcp.pop %v1071
        %v1268 = vmul.f32 %v1260, %v1264
        %v1269 = vmul.f32 %v1261, %v1265
        %v1270 = vmul.f32 %v1262, %v1266
        %v1271 = vmul.f32 %v1263, %v1267
        %v1272 = vcombine.low %v1268, %v1270
        %v1273 = vcombine.high %v1268, %v1270
        %v1275 = vunpack.c.l.s4 1983009808
        %v1276 = vunpack.c.0.s8 %v1275
        %v1277 = vlaneseq
        %v1278 = vshrl.u32 %v1277, 7
        %v1279 = vsub.s32 %v1276, %v1278
        %v1280 = vrot.slane %v1272, %v1279
        %v1282 = vunpack.c.l.s4 1983009808
        %v1283 = vunpack.c.0.s8 %v1282
        %v1284 = vlaneseq
        %v1285 = vshrl.u32 %v1284, 7
        %v1286 = vsub.s32 %v1283, %v1285
        %v1287 = vrot.slane %v1273, %v1286
        %v1288 = vcombine.low %v1269, %v1271
        %v1289 = vcombine.high %v1269, %v1271
        %v1291 = vunpack.c.l.s4 1983009808
        %v1292 = vunpack.c.0.s8 %v1291
        %v1293 = vlaneseq
        %v1294 = vshrl.u32 %v1293, 7
        %v1295 = vsub.s32 %v1292, %v1294
        %v1296 = vrot.slane %v1288, %v1295
        %v1298 = vunpack.c.l.s4 1983009808
        %v1299 = vunpack.c.0.s8 %v1298
        %v1300 = vlaneseq
        %v1301 = vshrl.u32 %v1300, 7
        %v1302 = vsub.s32 %v1299, %v1301
        %v1303 = vrot.slane %v1289, %v1302
        %v1304 = vcombine.low %v1280, %v1296
        %v1305 = vcombine.high %v1280, %v1296
        %v1307 = vunpack.c.l.s4 1934713408
        %v1308 = vunpack.c.0.s8 %v1307
        %v1309 = vlaneseq
        %v1310 = vshrl.u32 %v1309, 7
        %v1311 = vsub.s32 %v1308, %v1310
        %v1312 = vrot.slane %v1304, %v1311
        %v1314 = vunpack.c.l.s4 1934713408
        %v1315 = vunpack.c.0.s8 %v1314
        %v1316 = vlaneseq
        %v1317 = vshrl.u32 %v1316, 7
        %v1318 = vsub.s32 %v1315, %v1317
        %v1319 = vrot.slane %v1305, %v1318
        %v1320 = vcombine.low %v1287, %v1303
        %v1321 = vcombine.high %v1287, %v1303
        %v1323 = vunpack.c.l.s4 1934713408
        %v1324 = vunpack.c.0.s8 %v1323
        %v1325 = vlaneseq
        %v1326 = vshrl.u32 %v1325, 7
        %v1327 = vsub.s32 %v1324, %v1326
        %v1328 = vrot.slane %v1320, %v1327
        %v1330 = vunpack.c.l.s4 1934713408
        %v1331 = vunpack.c.0.s8 %v1330
        %v1332 = vlaneseq
        %v1333 = vshrl.u32 %v1332, 7
        %v1334 = vsub.s32 %v1331, %v1333
        %v1335 = vrot.slane %v1321, %v1334
        %v1336 = vcombine.high %v1312, 0.0
        %v1337 = vcombine.high %v1319, 0.0
        %v1338 = vcombine.high %v1328, 0.0
        %v1339 = vcombine.high %v1335, 0.0
        %v1340 = vcombine.low %v1312, %v1319
        %v1342 = vunpack.c.l.s4 1983009808
        %v1343 = vunpack.c.0.s8 %v1342
        %v1344 = vlaneseq
        %v1345 = vshrl.u32 %v1344, 7
        %v1346 = vsub.s32 %v1343, %v1345
        %v1347 = vrot.slane %v1340, %v1346
        %v1348 = vcombine.low %v1336, %v1337
        %v1350 = vunpack.c.l.s4 1983009808
        %v1351 = vunpack.c.0.s8 %v1350
        %v1352 = vlaneseq
        %v1353 = vshrl.u32 %v1352, 7
        %v1354 = vsub.s32 %v1351, %v1353
        %v1355 = vrot.slane %v1348, %v1354
        %v1356 = vcombine.low %v1328, %v1335
        %v1358 = vunpack.c.l.s4 1983009808
        %v1359 = vunpack.c.0.s8 %v1358
        %v1360 = vlaneseq
        %v1361 = vshrl.u32 %v1360, 7
        %v1362 = vsub.s32 %v1359, %v1361
        %v1363 = vrot.slane %v1356, %v1362
        %v1364 = vcombine.low %v1338, %v1339
        %v1366 = vunpack.c.l.s4 1983009808
        %v1367 = vunpack.c.0.s8 %v1366
        %v1368 = vlaneseq
        %v1369 = vshrl.u32 %v1368, 7
        %v1370 = vsub.s32 %v1367, %v1369
        %v1371 = vrot.slane %v1364, %v1370
        %v1372 = vcombine.low %v1347, %v1355
        %v1373 = vcombine.high %v1347, %v1355
        %v1375 = vunpack.c.l.s4 1934713408
        %v1376 = vunpack.c.0.s8 %v1375
        %v1377 = vlaneseq
        %v1378 = vshrl.u32 %v1377, 7
        %v1379 = vsub.s32 %v1376, %v1378
        %v1380 = vrot.slane %v1372, %v1379
        %v1382 = vunpack.c.l.s4 1934713408
        %v1383 = vunpack.c.0.s8 %v1382
        %v1384 = vlaneseq
        %v1385 = vshrl.u32 %v1384, 7
        %v1386 = vsub.s32 %v1383, %v1385
        %v1387 = vrot.slane %v1373, %v1386
        %v1388 = vcombine.low %v1363, %v1371
        %v1389 = vcombine.high %v1363, %v1371
        %v1391 = vunpack.c.l.s4 1934713408
        %v1392 = vunpack.c.0.s8 %v1391
        %v1393 = vlaneseq
        %v1394 = vshrl.u32 %v1393, 7
        %v1395 = vsub.s32 %v1392, %v1394
        %v1396 = vrot.slane %v1388, %v1395
        %v1398 = vunpack.c.l.s4 1934713408
        %v1399 = vunpack.c.0.s8 %v1398
        %v1400 = vlaneseq
        %v1401 = vshrl.u32 %v1400, 7
        %v1402 = vsub.s32 %v1399, %v1401
        %v1403 = vrot.slane %v1389, %v1402
        %v1404 = vcombine.low %v1380, %v1396
        %v1405 = vcombine.high %v1380, %v1396
        %v1406 = vcombine.low %v1387, %v1403
        %v1407 = vcombine.high %v1387, %v1403
        %1409 = vrot.lane.b32.xlu0 %v1405, 8
        %v1410 = vpop.permute.xlu0 %1409
        %1413 = vrot.lane.b32.xlu0 %v1406, 16
        %v1414 = vpop.permute.xlu0 %1413
        %1417 = vrot.lane.b32.xlu0 %v1407, 24
        %v1418 = vpop.permute.xlu0 %1417
        %v1420 = vsel %vm830, %v1404, %v1410
        %vm1421 = vcmask 130048
        %v1422 = vsel %vm1421, %v1420, %v1414
        %vm1423 = vcmask 195584
        %v1424 = vsel %vm1423, %v1422, %v1418
        %1425 = vst.msk [vmem:[%s374] sm:$0xff] %vm547, %v1424
        %s1426 = sand.u32 %s226, 1
        %s1427 = scalar_lea.sflag [#allocation6], %s1426
        %s1428 = sand.u32 %s226, 1
        %s1429 = smul.addr %s1428, 8
        %s1430 = scalar_lea.vmem [#allocation10], %s1429
        // Predicated region
        $region69: #{tpu_custom_call.1} parent=51 // pred_check
          %p1431 = pneg %p236
        $region70: #{tpu_custom_call.1} parent=51 // pred_check_branch
          %1433 = sbr.rel (%p1431) target = $region72
        $region71: #{tpu_custom_call.1} parent=51 // pred_region
          %s1435 = ssub.s32 128, 128
          %1436 = vsyncadd %s1427, %s1435
          %s1437 = sadd.s32 %s31, %s30
          %s1438 = smul.addr %s1437, 128
          %s1439 = scalar_lea.hbm %s8, %s1438
          %s1441 = sshll.u32 %s1430, 4
          %s1442 = int_to_ptr.vmem [resolvable:$true] %s1441
          %1444 = dma.vmem_to_hbm [thread:$0]  %s1442, 128, %s1439, %s1427
        $region72: #{tpu_custom_call.1} parent=51 // pred_fallthru
          _
      $region52: #{tpu_custom_call.1} parent=5 // pred_fallthru
        _
      %p1445 = scmp.le.s32.totalorder 2, %s21
      // Predicated region
      $region73: #{tpu_custom_call.1} parent=5 // pred_check
        %p1446 = pneg %p1445
      $region74: #{tpu_custom_call.1} parent=5 // pred_check_branch
        %1448 = sbr.rel (%p1446) target = $region76
      $region75: #{tpu_custom_call.1} parent=5 // pred_region
        %s1449 = ssub.s32 %s21, 2
        // Predicated region
        $region77: #{tpu_custom_call.1} parent=75 // pred_check
          %p1450 = pneg %p242
        $region78: #{tpu_custom_call.1} parent=75 // pred_check_branch
          %1452 = sbr.rel (%p1450) target = $region80
        $region79: #{tpu_custom_call.1} parent=75 // pred_region
          %s1453 = sand.u32 %s227, 1
          %s1454 = scalar_lea.sflag [#allocation6], %s1453
          %s1455 = sand.u32 %s227, 1
          %s1456 = smul.addr %s1455, 8
          %s1457 = scalar_lea.vmem [#allocation10], %s1456
          %1458 = dma.done %s1454, 128
        $region80: #{tpu_custom_call.1} parent=75 // pred_fallthru
          _
      $region76: #{tpu_custom_call.1} parent=5 // pred_fallthru
        _
    $region6: #{tpu_custom_call.1} parent=1 // loop_footer
      %s25 = sadd.s32 1, %s21
    $region7: #{tpu_custom_call.1} parent=1 // loop_footer_branch
      %20 = sbr.rel target = $region3
    $region8: #{tpu_custom_call.1} parent=1 // loop_exit
      _
    %1459 = vsyncpa [#allocation5], 1
    %s1460 = scalar_lea.sflag [#allocation5], 1
    %1461 = vsyncpa %s1460, 1
    %1462 = vsyncpa [#allocation8], 1
    %1463 = vsyncpa [#allocation6], 1
    %s1464 = scalar_lea.sflag [#allocation6], 1
    %1465 = vsyncpa %s1464, 1

</llo_original>
